<compile_context>
chip_gen: v7x
topology: tpu7x:2x2x1
jax: 0.10.0
libtpu: 0.0.40
codegen_flags: <defaults>
</compile_context>

<pallas_src>
from functools import partial

import jax
import jax.numpy as jnp
from jax.experimental import pallas as pl
from jax.experimental.pallas import tpu as pltpu


def _gru_chunk_kernel(tok_ref, gitab_ref, h0_ref, whh_ref, bias_ref,
                      out_ref, hT_ref, h_scr, gi_scr):
    c = pl.program_id(1)                      # time-chunk index (sequential axis)
    TB, BT = tok_ref.shape                    # (time_chunk, batch_tile)
    Vp = gitab_ref.shape[0]
    Hp = whh_ref.shape[0]
    Hact = out_ref.shape[-1]                  # un-padded hidden size for writeback
    cdt = gitab_ref.dtype

    @pl.when(c == 0)
    def _():                                  # re-fires for every batch group
        h_scr[...] = h0_ref[...]

    # ---- fused embedding gather + input projection, hoisted off the recurrence ---------
    tok = tok_ref[...]                                               # (TB, BT) int32
    lanes = jax.lax.broadcasted_iota(jnp.int32, (TB, BT, Vp), 2)
    onehot = (tok[:, :, None] == lanes).astype(cdt)                  # (TB, BT, Vp)
    gi = jnp.dot(onehot.reshape(TB * BT, Vp), gitab_ref[...],
                 preferred_element_type=jnp.float32)                 # (TB*BT, 3Hp)
    gi = gi + bias_ref[0:1, :]                # b_ih + b_hh[r,z] folded in, once per chunk
    gi_scr[...] = gi.reshape(TB, BT, 3 * Hp)  # explicit VMEM staging

    # ---- loop invariants hoisted (JAX does not CSE broadcasts) --------------------------
    whh = whh_ref[...]                                               # (Hp, 3Hp)
    whh_rz = whh[:, :2 * Hp]
    whh_n = whh[:, 2 * Hp:]
    bhh_n = jnp.broadcast_to(bias_ref[1:2, 2 * Hp:], (BT, Hp))       # n-gate hidden bias

    # ---- sequential recurrence; h stays a register/VMEM value over the chunk ------------
    h = h_scr[...]                                                   # (BT, Hp) f32
    for t in range(TB):
        hc = h.astype(cdt)
        gh_rz = jnp.dot(hc, whh_rz, preferred_element_type=jnp.float32)   # (BT, 2Hp)
        gh_n = jnp.dot(hc, whh_n, preferred_element_type=jnp.float32)     # (BT, Hp)
        gi_t = gi_scr[t]                                                  # (BT, 3Hp)
        r = jax.nn.sigmoid(gi_t[:, :Hp] + gh_rz[:, :Hp])
        z = jax.nn.sigmoid(gi_t[:, Hp:2 * Hp] + gh_rz[:, Hp:])
        n = jnp.tanh(gi_t[:, 2 * Hp:] + r * (gh_n + bhh_n))
        h = n + z * (h - n)                   # == (1 - z) * n + z * h
        out_ref[:, t, :] = h[:, :Hact].astype(out_ref.dtype)

    h_scr[...] = h
    hT_ref[...] = h[:, :Hact].astype(hT_ref.dtype)


def _round_up(v, m):
    return ((v + m - 1) // m) * m


def _vmem_estimate_bytes(bt, tb, Hp, H, Vp, cd_size):
    lanes_out = _round_up(max(H, 1), 128)
    est = 0
    est += 2 * bt * tb * 4                    # token block (double-buffered)
    est += 2 * Vp * 3 * Hp * cd_size          # pre-projected embedding table
    est += 2 * bt * Hp * 4                    # h0
    est += 2 * Hp * 3 * Hp * cd_size          # W_hh^T
    est += 2 * 2 * 3 * Hp * 4                 # fused biases
    est += 2 * bt * tb * lanes_out * 4        # output chunk
    est += 2 * bt * lanes_out * 4             # final hidden
    est += bt * Hp * 4                        # h carry scratch
    est += tb * bt * 3 * Hp * 4               # gi staging scratch
    return est


@partial(jax.jit, static_argnames=("time_chunk", "batch_tile", "compute_dtype"))
def encoder_rnn_forward(tokens, hidden, emb_table, w_ih, w_hh, b_ih, b_hh,
                        *, time_chunk=None, batch_tile=None, compute_dtype=jnp.bfloat16):
    """tokens (B,T) int32, hidden (1,B,H) f32 -> (output (B,T,H) f32, hidden (1,B,H) f32).

    Matches torch: out = embedding(tokens); out, h = GRU(out, hidden), batch_first=True.
    """
    B, T = tokens.shape
    V, H = emb_table.shape
    Hp = _round_up(H, 128)
    Vp = _round_up(V, 128)
    Bp = _round_up(B, 8)

    # ---- tiling choices ------------------------------------------------------------------
    bt = Bp if batch_tile is None else int(batch_tile)
    if bt % 8 != 0 or Bp % bt != 0:
        raise ValueError(f"batch_tile={bt} must be a multiple of 8 dividing padded batch {Bp}")
    nG = Bp // bt

    if time_chunk is None:
        tb = T
        for cand in (64, 32, 16, 8):          # target bt*tb >= 256 for the chunk matmul M dim
            if T % cand == 0:
                tb = cand
                break
    else:
        tb = int(time_chunk)
    if T % tb != 0:
        raise ValueError(f"time_chunk={tb} must divide T={T}")
    if tb % 8 != 0 and tb != T:
        raise ValueError(f"time_chunk={tb} must be a multiple of 8 (or equal to T={T})")
    nc = T // tb

    # ---- weight / bias packing (per-gate, lane-aligned, zero-preserving padding) ----------
    def pack_w(w):        # torch (3H, H), gate order r,z,n -> (Hp, 3Hp) transposed
        gates = [jnp.pad(w[g * H:(g + 1) * H, :].T.astype(jnp.float32),
                         ((0, Hp - H), (0, Hp - H))) for g in range(3)]
        return jnp.concatenate(gates, axis=1)

    def pack_b(vec):      # (3H,) -> (3Hp,)
        return jnp.concatenate([jnp.pad(vec[g * H:(g + 1) * H], (0, Hp - H))
                                for g in range(3)])

    # Fused embedding gather + input projection: one gi row per vocab entry, computed once.
    emb_p = jnp.pad(emb_table.astype(jnp.float32), ((0, Vp - V), (0, Hp - H)))
    gi_table = (emb_p @ pack_w(w_ih)).astype(compute_dtype)                   # (Vp, 3Hp)
    whh_p = pack_w(w_hh).astype(compute_dtype)                                # (Hp, 3Hp)

    zeros_h = jnp.zeros((H,), jnp.float32)
    b_row0 = pack_b(b_ih.astype(jnp.float32)
                    + jnp.concatenate([b_hh[:2 * H].astype(jnp.float32), zeros_h]))
    b_row1 = pack_b(jnp.concatenate([zeros_h, zeros_h, b_hh[2 * H:].astype(jnp.float32)]))
    bias_p = jnp.stack([b_row0, b_row1])                                      # (2, 3Hp) f32

    # ---- activations: only tiny int32 tokens + (Bp,Hp) h0 go to the kernel ----------------
    tokens_p = jnp.pad(tokens.astype(jnp.int32), ((0, Bp - B), (0, 0)))       # (Bp, T)
    tokens_r = jnp.transpose(tokens_p.reshape(nG, bt, T), (0, 2, 1))          # (nG, T, bt)
    h0_p = jnp.pad(hidden[0].astype(jnp.float32), ((0, Bp - B), (0, Hp - H))) # (Bp, Hp)

    # ---- VMEM budget derived from actual buffer sizes -------------------------------------
    cd_size = jnp.dtype(compute_dtype).itemsize
    est = _vmem_estimate_bytes(bt, tb, Hp, H, Vp, cd_size)
    try:
        cap = int(pltpu.get_tpu_info().vmem_capacity_bytes) - 8 * 2 ** 20     # leave headroom
        cap = max(cap, 32 * 2 ** 20)
    except Exception:
        cap = 96 * 2 ** 20                     # v5e/v6e-ish fallback; v7x queried above
    vmem_limit = int(min(cap, max(32 * 2 ** 20, 2 * est)))

    out_p, hT_p = pl.pallas_call(
        _gru_chunk_kernel,
        out_shape=(jax.ShapeDtypeStruct((Bp, T, H), jnp.float32),     # de-padded writeback
                   jax.ShapeDtypeStruct((Bp, H), jnp.float32)),
        grid_spec=pltpu.PrefetchScalarGridSpec(
            num_scalar_prefetch=0,
            grid=(nG, nc),
            in_specs=[
                pl.BlockSpec((None, tb, bt), lambda g, c: (g, c, 0)),  # tokens (time-major)
                pl.BlockSpec((Vp, 3 * Hp), lambda g, c: (0, 0)),       # emb @ W_ih^T table
                pl.BlockSpec((bt, Hp), lambda g, c: (g, 0)),           # h0
                pl.BlockSpec((Hp, 3 * Hp), lambda g, c: (0, 0)),       # W_hh^T
                pl.BlockSpec((2, 3 * Hp), lambda g, c: (0, 0)),        # fused biases
            ],
            out_specs=(
                pl.BlockSpec((bt, tb, H), lambda g, c: (g, c, 0)),     # lane-dense out slab
                pl.BlockSpec((bt, H), lambda g, c: (g, 0)),            # final hidden
            ),
            scratch_shapes=[
                pltpu.VMEM((bt, Hp), jnp.float32),          # carried hidden state
                pltpu.VMEM((tb, bt, 3 * Hp), jnp.float32),  # staged input projection
            ],
        ),
        compiler_params=pltpu.CompilerParams(
            dimension_semantics=("parallel", "arbitrary"),  # batch groups || , time sequential
            vmem_limit_bytes=vmem_limit,
        ),
    )(tokens_r, gi_table, h0_p, whh_p, bias_p)

    output = out_p[:B]                        # (B, T, H)
    hidden_out = hT_p[:B][None]               # (1, B, H)
    return output, hidden_out


def _reference_gru(tokens, hidden, emb_table, w_ih, w_hh, b_ih, b_hh):
    """Pure-JAX f32 reference (torch.nn.GRU semantics) for verification."""
    x = jnp.take(emb_table, tokens, axis=0)   # (B, T, H)
    H = emb_table.shape[1]
    h = hidden[0]

    def step(h, xt):
        gi = xt @ w_ih.T + b_ih
        gh = h @ w_hh.T + b_hh
        i_r, i_z, i_n = gi[:, :H], gi[:, H:2 * H], gi[:, 2 * H:]
        h_r, h_z, h_n = gh[:, :H], gh[:, H:2 * H], gh[:, 2 * H:]
        r = jax.nn.sigmoid(i_r + h_r)
        z = jax.nn.sigmoid(i_z + h_z)
        n = jnp.tanh(i_n + r * h_n)
        h_new = (1.0 - z) * n + z * h
        return h_new, h_new

    hT, outs = jax.lax.scan(step, h, jnp.transpose(x, (1, 0, 2)))
    return jnp.transpose(outs, (1, 0, 2)), hT[None]


if __name__ == "__main__":
    keys = jax.random.split(jax.random.PRNGKey(0), 12)

    # Config A: shapes consistent with the module (vocab=20, hidden=32, batch=2, seq=8).
    V, H, B, T = 20, 32, 2, 8
    bound = H ** -0.5
    emb_table = jax.random.normal(keys[0], (V, H), dtype=jnp.float32)
    w_ih = jax.random.uniform(keys[1], (3 * H, H), minval=-bound, maxval=bound, dtype=jnp.float32)
    w_hh = jax.random.uniform(keys[2], (3 * H, H), minval=-bound, maxval=bound, dtype=jnp.float32)
    b_ih = jax.random.uniform(keys[3], (3 * H,), minval=-bound, maxval=bound, dtype=jnp.float32)
    b_hh = jax.random.uniform(keys[4], (3 * H,), minval=-bound, maxval=bound, dtype=jnp.float32)
    tokens = jax.random.randint(keys[5], (B, T), 0, V, dtype=jnp.int32)
    hidden0 = jnp.zeros((1, B, H), dtype=jnp.float32)

    ref_out, ref_hid = _reference_gru(tokens, hidden0, emb_table, w_ih, w_hh, b_ih, b_hh)

    # 1) f32 MXU operands: must track the f32 reference closely (MXU f32 pass decomposition
    #    and bias re-association keep it within ~1e-5; assert at 1e-4).
    out32, hid32 = encoder_rnn_forward(tokens, hidden0, emb_table, w_ih, w_hh, b_ih, b_hh,
                                       compute_dtype=jnp.float32)
    jax.block_until_ready((out32, hid32))
    assert out32.shape == (B, T, H) and hid32.shape == (1, B, H)
    assert jnp.allclose(out32, ref_out, atol=1e-4, rtol=1e-4)
    assert jnp.allclose(hid32, ref_hid, atol=1e-4, rtol=1e-4)

    # 2) default fast path: bf16 MXU operands + f32 accumulation / f32 recurrence.
    outbf, hidbf = encoder_rnn_forward(tokens, hidden0, emb_table, w_ih, w_hh, b_ih, b_hh)
    jax.block_until_ready((outbf, hidbf))
    assert outbf.shape == (B, T, H) and hidbf.shape == (1, B, H)
    assert jnp.allclose(outbf, ref_out, atol=2e-2, rtol=2e-2)
    assert jnp.allclose(hidbf, ref_hid, atol=2e-2, rtol=2e-2)

    # 3) multi-chunk + multi-batch-group path: exercises the hidden-state carry across grid
    #    steps, the parallel batch axis, and non-(8,128)-aligned B/H/V padding.
    V2, H2, B2, T2 = 33, 48, 10, 32
    b2 = H2 ** -0.5
    emb2 = jax.random.normal(keys[6], (V2, H2), dtype=jnp.float32)
    w_ih2 = jax.random.uniform(keys[7], (3 * H2, H2), minval=-b2, maxval=b2, dtype=jnp.float32)
    w_hh2 = jax.random.uniform(keys[8], (3 * H2, H2), minval=-b2, maxval=b2, dtype=jnp.float32)
    b_ih2 = jax.random.uniform(keys[9], (3 * H2,), minval=-b2, maxval=b2, dtype=jnp.float32)
    b_hh2 = jax.random.uniform(keys[10], (3 * H2,), minval=-b2, maxval=b2, dtype=jnp.float32)
    tok2 = jax.random.randint(keys[11], (B2, T2), 0, V2, dtype=jnp.int32)
    hid20 = jnp.zeros((1, B2, H2), dtype=jnp.float32)

    out2, hT2 = encoder_rnn_forward(tok2, hid20, emb2, w_ih2, w_hh2, b_ih2, b_hh2,
                                    time_chunk=8, batch_tile=8, compute_dtype=jnp.float32)
    jax.block_until_ready((out2, hT2))
    r2o, r2h = _reference_gru(tok2, hid20, emb2, w_ih2, w_hh2, b_ih2, b_hh2)
    assert out2.shape == (B2, T2, H2) and hT2.shape == (1, B2, H2)
    assert jnp.allclose(out2, r2o, atol=2e-4, rtol=2e-4)
    assert jnp.allclose(hT2, r2h, atol=2e-4, rtol=2e-4)

    print("KERNEL_OK")
</pallas_src>

<mosaic_0001>
module attributes {stable_mosaic.version = 11 : i64} {
  func.func @_gru_chunk_kernel(%arg0: i32, %arg1: i32, %arg2: memref<1x8x8xi32, #tpu.memory_space<vmem>>, %arg3: memref<128x384xf32, #tpu.memory_space<vmem>>, %arg4: memref<8x128xf32, #tpu.memory_space<vmem>>, %arg5: memref<128x384xf32, #tpu.memory_space<vmem>>, %arg6: memref<2x384xf32, #tpu.memory_space<vmem>>, %arg7: memref<8x8x32xf32, #tpu.memory_space<vmem>>, %arg8: memref<8x32xf32, #tpu.memory_space<vmem>>, %arg9: memref<8x128xf32, #tpu.memory_space<vmem>>, %arg10: memref<8x8x384xf32, #tpu.memory_space<vmem>>) attributes {dimension_semantics = [#tpu.dimension_semantics<parallel>, #tpu.dimension_semantics<arbitrary>], iteration_bounds = array<i64: 1, 1>, scalar_prefetch = 0 : i64, scratch_operands = 2 : i64, tpu.core_type = #tpu.core_type<tc>, window_params = [{transform_indices = @transform_0, window_bounds = array<i64: 1, 8, 8>}, {pipeline_mode = #tpu.pipeline_mode<synchronous>, transform_indices = @transform_1, window_bounds = array<i64: 128, 384>}, {transform_indices = @transform_2, window_bounds = array<i64: 8, 128>}, {pipeline_mode = #tpu.pipeline_mode<synchronous>, transform_indices = @transform_3, window_bounds = array<i64: 128, 384>}, {pipeline_mode = #tpu.pipeline_mode<synchronous>, transform_indices = @transform_4, window_bounds = array<i64: 2, 384>}, {transform_indices = @transform_5, window_bounds = array<i64: 8, 8, 32>}, {transform_indices = @transform_6, window_bounds = array<i64: 8, 32>}]} {
    %c0_i32 = arith.constant 0 : i32
    %0 = arith.cmpi eq, %arg1, %c0_i32 : i32
    %1 = arith.extui %0 : i1 to i32
    %c0_i32_0 = arith.constant 0 : i32
    %2 = arith.cmpi ne, %1, %c0_i32_0 : i32
    scf.if %2 {
      %c0_92 = arith.constant 0 : index
      %c0_93 = arith.constant 0 : index
      %285 = vector.load %arg4[%c0_92, %c0_93] : memref<8x128xf32, #tpu.memory_space<vmem>>, vector<8x128xf32>
      %c0_94 = arith.constant 0 : index
      %c0_95 = arith.constant 0 : index
      %286 = vector.load %arg9[%c0_94, %c0_95] : memref<8x128xf32, #tpu.memory_space<vmem>>, vector<8x128xf32>
      tpu.vector_store %arg9[%c0_94, %c0_95], %285 {strides = array<i32>} : memref<8x128xf32, #tpu.memory_space<vmem>>, vector<8x128xf32>,
    } else {
    }
    %c0 = arith.constant 0 : index
    %c0_1 = arith.constant 0 : index
    %c0_2 = arith.constant 0 : index
    %3 = vector.load %arg2[%c0, %c0_1, %c0_2] : memref<1x8x8xi32, #tpu.memory_space<vmem>>, vector<1x8x8xi32>
    %4 = vector.shape_cast %3 : vector<1x8x8xi32> to vector<8x8xi32>
    %5 = tpu.iota {dimensions = array<i32: 2>} : vector<8x8x128xi32>
    %6 = vector.shape_cast %4 : vector<8x8xi32> to vector<8x8x1xi32>
    %7 = vector.broadcast %6 : vector<8x8x1xi32> to vector<8x8x128xi32>
    %8 = arith.cmpi eq, %7, %5 : vector<8x8x128xi32>
    %9 = arith.extui %8 : vector<8x8x128xi1> to vector<8x8x128xi32>
    %10 = arith.sitofp %9 : vector<8x8x128xi32> to vector<8x8x128xf32>
    %11 = vector.shape_cast %10 : vector<8x8x128xf32> to vector<64x128xf32>
    %c0_3 = arith.constant 0 : index
    %c0_4 = arith.constant 0 : index
    %12 = vector.load %arg3[%c0_3, %c0_4] : memref<128x384xf32, #tpu.memory_space<vmem>>, vector<128x384xf32>
    %cst = arith.constant dense<0.000000e+00> : vector<64x384xf32>
    %13 = tpu.matmul %11, %12, %cst {dimension_numbers = #tpu.dot_dimension_numbers<[1], [0], [0], [1], [0, 0, 1, 1], [], []>} : vector<64x128xf32>, vector<128x384xf32>, vector<64x384xf32> -> vector<64x384xf32>
    %c0_5 = arith.constant 0 : index
    %c0_6 = arith.constant 0 : index
    %14 = vector.load %arg6[%c0_5, %c0_6] : memref<2x384xf32, #tpu.memory_space<vmem>>, vector<1x384xf32>
    %15 = vector.broadcast %14 : vector<1x384xf32> to vector<64x384xf32>
    %16 = arith.addf %13, %15 : vector<64x384xf32>
    %17 = vector.shape_cast %16 : vector<64x384xf32> to vector<8x8x384xf32>
    %c0_7 = arith.constant 0 : index
    %c0_8 = arith.constant 0 : index
    %c0_9 = arith.constant 0 : index
    %18 = vector.load %arg10[%c0_7, %c0_8, %c0_9] : memref<8x8x384xf32, #tpu.memory_space<vmem>>, vector<8x8x384xf32>
    tpu.vector_store %arg10[%c0_7, %c0_8, %c0_9], %17 {strides = array<i32>} : memref<8x8x384xf32, #tpu.memory_space<vmem>>, vector<8x8x384xf32>,
    %c0_10 = arith.constant 0 : index
    %c0_11 = arith.constant 0 : index
    %19 = vector.load %arg5[%c0_10, %c0_11] : memref<128x384xf32, #tpu.memory_space<vmem>>, vector<128x384xf32>
    %20 = vector.extract_strided_slice %19 {offsets = [0, 0], sizes = [128, 256], strides = [1, 1]} : vector<128x384xf32> to vector<128x256xf32>
    %21 = vector.extract_strided_slice %19 {offsets = [0, 256], sizes = [128, 128], strides = [1, 1]} : vector<128x384xf32> to vector<128x128xf32>
    %c1 = arith.constant 1 : index
    %c256 = arith.constant 256 : index
    %22 = vector.load %arg6[%c1, %c256] : memref<2x384xf32, #tpu.memory_space<vmem>>, vector<1x128xf32>
    %23 = vector.shape_cast %22 : vector<1x128xf32> to vector<1x128xf32>
    %24 = vector.broadcast %23 : vector<1x128xf32> to vector<8x128xf32>
    %c0_12 = arith.constant 0 : index
    %c0_13 = arith.constant 0 : index
    %25 = vector.load %arg9[%c0_12, %c0_13] : memref<8x128xf32, #tpu.memory_space<vmem>>, vector<8x128xf32>
    %cst_14 = arith.constant dense<0.000000e+00> : vector<8x256xf32>
    %26 = tpu.matmul %25, %20, %cst_14 {dimension_numbers = #tpu.dot_dimension_numbers<[1], [0], [0], [1], [0, 0, 1, 1], [], []>} : vector<8x128xf32>, vector<128x256xf32>, vector<8x256xf32> -> vector<8x256xf32>
    %cst_15 = arith.constant dense<0.000000e+00> : vector<8x128xf32>
    %27 = tpu.matmul %25, %21, %cst_15 {dimension_numbers = #tpu.dot_dimension_numbers<[1], [0], [0], [1], [0, 0, 1, 1], [], []>} : vector<8x128xf32>, vector<128x128xf32>, vector<8x128xf32> -> vector<8x128xf32>
    %c0_16 = arith.constant 0 : index
    %c0_17 = arith.constant 0 : index
    %c0_18 = arith.constant 0 : index
    %28 = vector.load %arg10[%c0_16, %c0_17, %c0_18] : memref<8x8x384xf32, #tpu.memory_space<vmem>>, vector<1x8x384xf32>
    %29 = vector.shape_cast %28 : vector<1x8x384xf32> to vector<8x384xf32>
    %30 = vector.extract_strided_slice %29 {offsets = [0, 0], sizes = [8, 128], strides = [1, 1]} : vector<8x384xf32> to vector<8x128xf32>
    %31 = vector.extract_strided_slice %26 {offsets = [0, 0], sizes = [8, 128], strides = [1, 1]} : vector<8x256xf32> to vector<8x128xf32>
    %32 = arith.addf %30, %31 : vector<8x128xf32>
    %33 = arith.negf %32 : vector<8x128xf32>
    %34 = math.exp %33 : vector<8x128xf32>
    %cst_19 = arith.constant 1.000000e+00 : f32
    %35 = vector.broadcast %cst_19 : f32 to vector<8x128xf32>
    %36 = arith.addf %35, %34 : vector<8x128xf32>
    %37 = arith.divf %35, %36 : vector<8x128xf32>
    %38 = vector.extract_strided_slice %29 {offsets = [0, 128], sizes = [8, 128], strides = [1, 1]} : vector<8x384xf32> to vector<8x128xf32>
    %39 = vector.extract_strided_slice %26 {offsets = [0, 128], sizes = [8, 128], strides = [1, 1]} : vector<8x256xf32> to vector<8x128xf32>
    %40 = arith.addf %38, %39 : vector<8x128xf32>
    %41 = arith.negf %40 : vector<8x128xf32>
    %42 = math.exp %41 : vector<8x128xf32>
    %cst_20 = arith.constant 1.000000e+00 : f32
    %43 = vector.broadcast %cst_20 : f32 to vector<8x128xf32>
    %44 = arith.addf %43, %42 : vector<8x128xf32>
    %45 = arith.divf %43, %44 : vector<8x128xf32>
    %46 = vector.extract_strided_slice %29 {offsets = [0, 256], sizes = [8, 128], strides = [1, 1]} : vector<8x384xf32> to vector<8x128xf32>
    %47 = arith.addf %27, %24 : vector<8x128xf32>
    %48 = arith.mulf %37, %47 : vector<8x128xf32>
    %49 = arith.addf %46, %48 : vector<8x128xf32>
    %50 = math.tanh %49 : vector<8x128xf32>
    %51 = arith.subf %25, %50 : vector<8x128xf32>
    %52 = arith.mulf %45, %51 : vector<8x128xf32>
    %53 = arith.addf %50, %52 : vector<8x128xf32>
    %54 = vector.extract_strided_slice %53 {offsets = [0, 0], sizes = [8, 32], strides = [1, 1]} : vector<8x128xf32> to vector<8x32xf32>
    %c0_21 = arith.constant 0 : index
    %c0_22 = arith.constant 0 : index
    %c0_23 = arith.constant 0 : index
    %55 = vector.load %arg7[%c0_21, %c0_22, %c0_23] : memref<8x8x32xf32, #tpu.memory_space<vmem>>, vector<8x1x32xf32>
    %56 = vector.shape_cast %55 : vector<8x1x32xf32> to vector<8x32xf32>
    %57 = vector.shape_cast %54 : vector<8x32xf32> to vector<8x1x32xf32>
    tpu.vector_store %arg7[%c0_21, %c0_22, %c0_23], %57 {strides = array<i32>} : memref<8x8x32xf32, #tpu.memory_space<vmem>>, vector<8x1x32xf32>,
    %cst_24 = arith.constant dense<0.000000e+00> : vector<8x256xf32>
    %58 = tpu.matmul %53, %20, %cst_24 {dimension_numbers = #tpu.dot_dimension_numbers<[1], [0], [0], [1], [0, 0, 1, 1], [], []>} : vector<8x128xf32>, vector<128x256xf32>, vector<8x256xf32> -> vector<8x256xf32>
    %cst_25 = arith.constant dense<0.000000e+00> : vector<8x128xf32>
    %59 = tpu.matmul %53, %21, %cst_25 {dimension_numbers = #tpu.dot_dimension_numbers<[1], [0], [0], [1], [0, 0, 1, 1], [], []>} : vector<8x128xf32>, vector<128x128xf32>, vector<8x128xf32> -> vector<8x128xf32>
    %c1_26 = arith.constant 1 : index
    %c0_27 = arith.constant 0 : index
    %c0_28 = arith.constant 0 : index
    %60 = vector.load %arg10[%c1_26, %c0_27, %c0_28] : memref<8x8x384xf32, #tpu.memory_space<vmem>>, vector<1x8x384xf32>
    %61 = vector.shape_cast %60 : vector<1x8x384xf32> to vector<8x384xf32>
    %62 = vector.extract_strided_slice %61 {offsets = [0, 0], sizes = [8, 128], strides = [1, 1]} : vector<8x384xf32> to vector<8x128xf32>
    %63 = vector.extract_strided_slice %58 {offsets = [0, 0], sizes = [8, 128], strides = [1, 1]} : vector<8x256xf32> to vector<8x128xf32>
    %64 = arith.addf %62, %63 : vector<8x128xf32>
    %65 = arith.negf %64 : vector<8x128xf32>
    %66 = math.exp %65 : vector<8x128xf32>
    %cst_29 = arith.constant 1.000000e+00 : f32
    %67 = vector.broadcast %cst_29 : f32 to vector<8x128xf32>
    %68 = arith.addf %67, %66 : vector<8x128xf32>
    %69 = arith.divf %67, %68 : vector<8x128xf32>
    %70 = vector.extract_strided_slice %61 {offsets = [0, 128], sizes = [8, 128], strides = [1, 1]} : vector<8x384xf32> to vector<8x128xf32>
    %71 = vector.extract_strided_slice %58 {offsets = [0, 128], sizes = [8, 128], strides = [1, 1]} : vector<8x256xf32> to vector<8x128xf32>
    %72 = arith.addf %70, %71 : vector<8x128xf32>
    %73 = arith.negf %72 : vector<8x128xf32>
    %74 = math.exp %73 : vector<8x128xf32>
    %cst_30 = arith.constant 1.000000e+00 : f32
    %75 = vector.broadcast %cst_30 : f32 to vector<8x128xf32>
    %76 = arith.addf %75, %74 : vector<8x128xf32>
    %77 = arith.divf %75, %76 : vector<8x128xf32>
    %78 = vector.extract_strided_slice %61 {offsets = [0, 256], sizes = [8, 128], strides = [1, 1]} : vector<8x384xf32> to vector<8x128xf32>
    %79 = arith.addf %59, %24 : vector<8x128xf32>
    %80 = arith.mulf %69, %79 : vector<8x128xf32>
    %81 = arith.addf %78, %80 : vector<8x128xf32>
    %82 = math.tanh %81 : vector<8x128xf32>
    %83 = arith.subf %53, %82 : vector<8x128xf32>
    %84 = arith.mulf %77, %83 : vector<8x128xf32>
    %85 = arith.addf %82, %84 : vector<8x128xf32>
    %86 = vector.extract_strided_slice %85 {offsets = [0, 0], sizes = [8, 32], strides = [1, 1]} : vector<8x128xf32> to vector<8x32xf32>
    %c0_31 = arith.constant 0 : index
    %c1_32 = arith.constant 1 : index
    %c0_33 = arith.constant 0 : index
    %87 = vector.load %arg7[%c0_31, %c1_32, %c0_33] : memref<8x8x32xf32, #tpu.memory_space<vmem>>, vector<8x1x32xf32>
    %88 = vector.shape_cast %87 : vector<8x1x32xf32> to vector<8x32xf32>
    %89 = vector.shape_cast %86 : vector<8x32xf32> to vector<8x1x32xf32>
    tpu.vector_store %arg7[%c0_31, %c1_32, %c0_33], %89 {strides = array<i32>} : memref<8x8x32xf32, #tpu.memory_space<vmem>>, vector<8x1x32xf32>,
    %cst_34 = arith.constant dense<0.000000e+00> : vector<8x256xf32>
    %90 = tpu.matmul %85, %20, %cst_34 {dimension_numbers = #tpu.dot_dimension_numbers<[1], [0], [0], [1], [0, 0, 1, 1], [], []>} : vector<8x128xf32>, vector<128x256xf32>, vector<8x256xf32> -> vector<8x256xf32>
    %cst_35 = arith.constant dense<0.000000e+00> : vector<8x128xf32>
    %91 = tpu.matmul %85, %21, %cst_35 {dimension_numbers = #tpu.dot_dimension_numbers<[1], [0], [0], [1], [0, 0, 1, 1], [], []>} : vector<8x128xf32>, vector<128x128xf32>, vector<8x128xf32> -> vector<8x128xf32>
    %c2 = arith.constant 2 : index
    %c0_36 = arith.constant 0 : index
    %c0_37 = arith.constant 0 : index
    %92 = vector.load %arg10[%c2, %c0_36, %c0_37] : memref<8x8x384xf32, #tpu.memory_space<vmem>>, vector<1x8x384xf32>
    %93 = vector.shape_cast %92 : vector<1x8x384xf32> to vector<8x384xf32>
    %94 = vector.extract_strided_slice %93 {offsets = [0, 0], sizes = [8, 128], strides = [1, 1]} : vector<8x384xf32> to vector<8x128xf32>
    %95 = vector.extract_strided_slice %90 {offsets = [0, 0], sizes = [8, 128], strides = [1, 1]} : vector<8x256xf32> to vector<8x128xf32>
    %96 = arith.addf %94, %95 : vector<8x128xf32>
    %97 = arith.negf %96 : vector<8x128xf32>
    %98 = math.exp %97 : vector<8x128xf32>
    %cst_38 = arith.constant 1.000000e+00 : f32
    %99 = vector.broadcast %cst_38 : f32 to vector<8x128xf32>
    %100 = arith.addf %99, %98 : vector<8x128xf32>
    %101 = arith.divf %99, %100 : vector<8x128xf32>
    %102 = vector.extract_strided_slice %93 {offsets = [0, 128], sizes = [8, 128], strides = [1, 1]} : vector<8x384xf32> to vector<8x128xf32>
    %103 = vector.extract_strided_slice %90 {offsets = [0, 128], sizes = [8, 128], strides = [1, 1]} : vector<8x256xf32> to vector<8x128xf32>
    %104 = arith.addf %102, %103 : vector<8x128xf32>
    %105 = arith.negf %104 : vector<8x128xf32>
    %106 = math.exp %105 : vector<8x128xf32>
    %cst_39 = arith.constant 1.000000e+00 : f32
    %107 = vector.broadcast %cst_39 : f32 to vector<8x128xf32>
    %108 = arith.addf %107, %106 : vector<8x128xf32>
    %109 = arith.divf %107, %108 : vector<8x128xf32>
    %110 = vector.extract_strided_slice %93 {offsets = [0, 256], sizes = [8, 128], strides = [1, 1]} : vector<8x384xf32> to vector<8x128xf32>
    %111 = arith.addf %91, %24 : vector<8x128xf32>
    %112 = arith.mulf %101, %111 : vector<8x128xf32>
    %113 = arith.addf %110, %112 : vector<8x128xf32>
    %114 = math.tanh %113 : vector<8x128xf32>
    %115 = arith.subf %85, %114 : vector<8x128xf32>
    %116 = arith.mulf %109, %115 : vector<8x128xf32>
    %117 = arith.addf %114, %116 : vector<8x128xf32>
    %118 = vector.extract_strided_slice %117 {offsets = [0, 0], sizes = [8, 32], strides = [1, 1]} : vector<8x128xf32> to vector<8x32xf32>
    %c0_40 = arith.constant 0 : index
    %c2_41 = arith.constant 2 : index
    %c0_42 = arith.constant 0 : index
    %119 = vector.load %arg7[%c0_40, %c2_41, %c0_42] : memref<8x8x32xf32, #tpu.memory_space<vmem>>, vector<8x1x32xf32>
    %120 = vector.shape_cast %119 : vector<8x1x32xf32> to vector<8x32xf32>
    %121 = vector.shape_cast %118 : vector<8x32xf32> to vector<8x1x32xf32>
    tpu.vector_store %arg7[%c0_40, %c2_41, %c0_42], %121 {strides = array<i32>} : memref<8x8x32xf32, #tpu.memory_space<vmem>>, vector<8x1x32xf32>,
    %cst_43 = arith.constant dense<0.000000e+00> : vector<8x256xf32>
    %122 = tpu.matmul %117, %20, %cst_43 {dimension_numbers = #tpu.dot_dimension_numbers<[1], [0], [0], [1], [0, 0, 1, 1], [], []>} : vector<8x128xf32>, vector<128x256xf32>, vector<8x256xf32> -> vector<8x256xf32>
    %cst_44 = arith.constant dense<0.000000e+00> : vector<8x128xf32>
    %123 = tpu.matmul %117, %21, %cst_44 {dimension_numbers = #tpu.dot_dimension_numbers<[1], [0], [0], [1], [0, 0, 1, 1], [], []>} : vector<8x128xf32>, vector<128x128xf32>, vector<8x128xf32> -> vector<8x128xf32>
    %c3 = arith.constant 3 : index
    %c0_45 = arith.constant 0 : index
    %c0_46 = arith.constant 0 : index
    %124 = vector.load %arg10[%c3, %c0_45, %c0_46] : memref<8x8x384xf32, #tpu.memory_space<vmem>>, vector<1x8x384xf32>
    %125 = vector.shape_cast %124 : vector<1x8x384xf32> to vector<8x384xf32>
    %126 = vector.extract_strided_slice %125 {offsets = [0, 0], sizes = [8, 128], strides = [1, 1]} : vector<8x384xf32> to vector<8x128xf32>
    %127 = vector.extract_strided_slice %122 {offsets = [0, 0], sizes = [8, 128], strides = [1, 1]} : vector<8x256xf32> to vector<8x128xf32>
    %128 = arith.addf %126, %127 : vector<8x128xf32>
    %129 = arith.negf %128 : vector<8x128xf32>
    %130 = math.exp %129 : vector<8x128xf32>
    %cst_47 = arith.constant 1.000000e+00 : f32
    %131 = vector.broadcast %cst_47 : f32 to vector<8x128xf32>
    %132 = arith.addf %131, %130 : vector<8x128xf32>
    %133 = arith.divf %131, %132 : vector<8x128xf32>
    %134 = vector.extract_strided_slice %125 {offsets = [0, 128], sizes = [8, 128], strides = [1, 1]} : vector<8x384xf32> to vector<8x128xf32>
    %135 = vector.extract_strided_slice %122 {offsets = [0, 128], sizes = [8, 128], strides = [1, 1]} : vector<8x256xf32> to vector<8x128xf32>
    %136 = arith.addf %134, %135 : vector<8x128xf32>
    %137 = arith.negf %136 : vector<8x128xf32>
    %138 = math.exp %137 : vector<8x128xf32>
    %cst_48 = arith.constant 1.000000e+00 : f32
    %139 = vector.broadcast %cst_48 : f32 to vector<8x128xf32>
    %140 = arith.addf %139, %138 : vector<8x128xf32>
    %141 = arith.divf %139, %140 : vector<8x128xf32>
    %142 = vector.extract_strided_slice %125 {offsets = [0, 256], sizes = [8, 128], strides = [1, 1]} : vector<8x384xf32> to vector<8x128xf32>
    %143 = arith.addf %123, %24 : vector<8x128xf32>
    %144 = arith.mulf %133, %143 : vector<8x128xf32>
    %145 = arith.addf %142, %144 : vector<8x128xf32>
    %146 = math.tanh %145 : vector<8x128xf32>
    %147 = arith.subf %117, %146 : vector<8x128xf32>
    %148 = arith.mulf %141, %147 : vector<8x128xf32>
    %149 = arith.addf %146, %148 : vector<8x128xf32>
    %150 = vector.extract_strided_slice %149 {offsets = [0, 0], sizes = [8, 32], strides = [1, 1]} : vector<8x128xf32> to vector<8x32xf32>
    %c0_49 = arith.constant 0 : index
    %c3_50 = arith.constant 3 : index
    %c0_51 = arith.constant 0 : index
    %151 = vector.load %arg7[%c0_49, %c3_50, %c0_51] : memref<8x8x32xf32, #tpu.memory_space<vmem>>, vector<8x1x32xf32>
    %152 = vector.shape_cast %151 : vector<8x1x32xf32> to vector<8x32xf32>
    %153 = vector.shape_cast %150 : vector<8x32xf32> to vector<8x1x32xf32>
    tpu.vector_store %arg7[%c0_49, %c3_50, %c0_51], %153 {strides = array<i32>} : memref<8x8x32xf32, #tpu.memory_space<vmem>>, vector<8x1x32xf32>,
    %cst_52 = arith.constant dense<0.000000e+00> : vector<8x256xf32>
    %154 = tpu.matmul %149, %20, %cst_52 {dimension_numbers = #tpu.dot_dimension_numbers<[1], [0], [0], [1], [0, 0, 1, 1], [], []>} : vector<8x128xf32>, vector<128x256xf32>, vector<8x256xf32> -> vector<8x256xf32>
    %cst_53 = arith.constant dense<0.000000e+00> : vector<8x128xf32>
    %155 = tpu.matmul %149, %21, %cst_53 {dimension_numbers = #tpu.dot_dimension_numbers<[1], [0], [0], [1], [0, 0, 1, 1], [], []>} : vector<8x128xf32>, vector<128x128xf32>, vector<8x128xf32> -> vector<8x128xf32>
    %c4 = arith.constant 4 : index
    %c0_54 = arith.constant 0 : index
    %c0_55 = arith.constant 0 : index
    %156 = vector.load %arg10[%c4, %c0_54, %c0_55] : memref<8x8x384xf32, #tpu.memory_space<vmem>>, vector<1x8x384xf32>
    %157 = vector.shape_cast %156 : vector<1x8x384xf32> to vector<8x384xf32>
    %158 = vector.extract_strided_slice %157 {offsets = [0, 0], sizes = [8, 128], strides = [1, 1]} : vector<8x384xf32> to vector<8x128xf32>
    %159 = vector.extract_strided_slice %154 {offsets = [0, 0], sizes = [8, 128], strides = [1, 1]} : vector<8x256xf32> to vector<8x128xf32>
    %160 = arith.addf %158, %159 : vector<8x128xf32>
    %161 = arith.negf %160 : vector<8x128xf32>
    %162 = math.exp %161 : vector<8x128xf32>
    %cst_56 = arith.constant 1.000000e+00 : f32
    %163 = vector.broadcast %cst_56 : f32 to vector<8x128xf32>
    %164 = arith.addf %163, %162 : vector<8x128xf32>
    %165 = arith.divf %163, %164 : vector<8x128xf32>
    %166 = vector.extract_strided_slice %157 {offsets = [0, 128], sizes = [8, 128], strides = [1, 1]} : vector<8x384xf32> to vector<8x128xf32>
    %167 = vector.extract_strided_slice %154 {offsets = [0, 128], sizes = [8, 128], strides = [1, 1]} : vector<8x256xf32> to vector<8x128xf32>
    %168 = arith.addf %166, %167 : vector<8x128xf32>
    %169 = arith.negf %168 : vector<8x128xf32>
    %170 = math.exp %169 : vector<8x128xf32>
    %cst_57 = arith.constant 1.000000e+00 : f32
    %171 = vector.broadcast %cst_57 : f32 to vector<8x128xf32>
    %172 = arith.addf %171, %170 : vector<8x128xf32>
    %173 = arith.divf %171, %172 : vector<8x128xf32>
    %174 = vector.extract_strided_slice %157 {offsets = [0, 256], sizes = [8, 128], strides = [1, 1]} : vector<8x384xf32> to vector<8x128xf32>
    %175 = arith.addf %155, %24 : vector<8x128xf32>
    %176 = arith.mulf %165, %175 : vector<8x128xf32>
    %177 = arith.addf %174, %176 : vector<8x128xf32>
    %178 = math.tanh %177 : vector<8x128xf32>
    %179 = arith.subf %149, %178 : vector<8x128xf32>
    %180 = arith.mulf %173, %179 : vector<8x128xf32>
    %181 = arith.addf %178, %180 : vector<8x128xf32>
    %182 = vector.extract_strided_slice %181 {offsets = [0, 0], sizes = [8, 32], strides = [1, 1]} : vector<8x128xf32> to vector<8x32xf32>
    %c0_58 = arith.constant 0 : index
    %c4_59 = arith.constant 4 : index
    %c0_60 = arith.constant 0 : index
    %183 = vector.load %arg7[%c0_58, %c4_59, %c0_60] : memref<8x8x32xf32, #tpu.memory_space<vmem>>, vector<8x1x32xf32>
    %184 = vector.shape_cast %183 : vector<8x1x32xf32> to vector<8x32xf32>
    %185 = vector.shape_cast %182 : vector<8x32xf32> to vector<8x1x32xf32>
    tpu.vector_store %arg7[%c0_58, %c4_59, %c0_60], %185 {strides = array<i32>} : memref<8x8x32xf32, #tpu.memory_space<vmem>>, vector<8x1x32xf32>,
    %cst_61 = arith.constant dense<0.000000e+00> : vector<8x256xf32>
    %186 = tpu.matmul %181, %20, %cst_61 {dimension_numbers = #tpu.dot_dimension_numbers<[1], [0], [0], [1], [0, 0, 1, 1], [], []>} : vector<8x128xf32>, vector<128x256xf32>, vector<8x256xf32> -> vector<8x256xf32>
    %cst_62 = arith.constant dense<0.000000e+00> : vector<8x128xf32>
    %187 = tpu.matmul %181, %21, %cst_62 {dimension_numbers = #tpu.dot_dimension_numbers<[1], [0], [0], [1], [0, 0, 1, 1], [], []>} : vector<8x128xf32>, vector<128x128xf32>, vector<8x128xf32> -> vector<8x128xf32>
    %c5 = arith.constant 5 : index
    %c0_63 = arith.constant 0 : index
    %c0_64 = arith.constant 0 : index
    %188 = vector.load %arg10[%c5, %c0_63, %c0_64] : memref<8x8x384xf32, #tpu.memory_space<vmem>>, vector<1x8x384xf32>
    %189 = vector.shape_cast %188 : vector<1x8x384xf32> to vector<8x384xf32>
    %190 = vector.extract_strided_slice %189 {offsets = [0, 0], sizes = [8, 128], strides = [1, 1]} : vector<8x384xf32> to vector<8x128xf32>
    %191 = vector.extract_strided_slice %186 {offsets = [0, 0], sizes = [8, 128], strides = [1, 1]} : vector<8x256xf32> to vector<8x128xf32>
    %192 = arith.addf %190, %191 : vector<8x128xf32>
    %193 = arith.negf %192 : vector<8x128xf32>
    %194 = math.exp %193 : vector<8x128xf32>
    %cst_65 = arith.constant 1.000000e+00 : f32
    %195 = vector.broadcast %cst_65 : f32 to vector<8x128xf32>
    %196 = arith.addf %195, %194 : vector<8x128xf32>
    %197 = arith.divf %195, %196 : vector<8x128xf32>
    %198 = vector.extract_strided_slice %189 {offsets = [0, 128], sizes = [8, 128], strides = [1, 1]} : vector<8x384xf32> to vector<8x128xf32>
    %199 = vector.extract_strided_slice %186 {offsets = [0, 128], sizes = [8, 128], strides = [1, 1]} : vector<8x256xf32> to vector<8x128xf32>
    %200 = arith.addf %198, %199 : vector<8x128xf32>
    %201 = arith.negf %200 : vector<8x128xf32>
    %202 = math.exp %201 : vector<8x128xf32>
    %cst_66 = arith.constant 1.000000e+00 : f32
    %203 = vector.broadcast %cst_66 : f32 to vector<8x128xf32>
    %204 = arith.addf %203, %202 : vector<8x128xf32>
    %205 = arith.divf %203, %204 : vector<8x128xf32>
    %206 = vector.extract_strided_slice %189 {offsets = [0, 256], sizes = [8, 128], strides = [1, 1]} : vector<8x384xf32> to vector<8x128xf32>
    %207 = arith.addf %187, %24 : vector<8x128xf32>
    %208 = arith.mulf %197, %207 : vector<8x128xf32>
    %209 = arith.addf %206, %208 : vector<8x128xf32>
    %210 = math.tanh %209 : vector<8x128xf32>
    %211 = arith.subf %181, %210 : vector<8x128xf32>
    %212 = arith.mulf %205, %211 : vector<8x128xf32>
    %213 = arith.addf %210, %212 : vector<8x128xf32>
    %214 = vector.extract_strided_slice %213 {offsets = [0, 0], sizes = [8, 32], strides = [1, 1]} : vector<8x128xf32> to vector<8x32xf32>
    %c0_67 = arith.constant 0 : index
    %c5_68 = arith.constant 5 : index
    %c0_69 = arith.constant 0 : index
    %215 = vector.load %arg7[%c0_67, %c5_68, %c0_69] : memref<8x8x32xf32, #tpu.memory_space<vmem>>, vector<8x1x32xf32>
    %216 = vector.shape_cast %215 : vector<8x1x32xf32> to vector<8x32xf32>
    %217 = vector.shape_cast %214 : vector<8x32xf32> to vector<8x1x32xf32>
    tpu.vector_store %arg7[%c0_67, %c5_68, %c0_69], %217 {strides = array<i32>} : memref<8x8x32xf32, #tpu.memory_space<vmem>>, vector<8x1x32xf32>,
    %cst_70 = arith.constant dense<0.000000e+00> : vector<8x256xf32>
    %218 = tpu.matmul %213, %20, %cst_70 {dimension_numbers = #tpu.dot_dimension_numbers<[1], [0], [0], [1], [0, 0, 1, 1], [], []>} : vector<8x128xf32>, vector<128x256xf32>, vector<8x256xf32> -> vector<8x256xf32>
    %cst_71 = arith.constant dense<0.000000e+00> : vector<8x128xf32>
    %219 = tpu.matmul %213, %21, %cst_71 {dimension_numbers = #tpu.dot_dimension_numbers<[1], [0], [0], [1], [0, 0, 1, 1], [], []>} : vector<8x128xf32>, vector<128x128xf32>, vector<8x128xf32> -> vector<8x128xf32>
    %c6 = arith.constant 6 : index
    %c0_72 = arith.constant 0 : index
    %c0_73 = arith.constant 0 : index
    %220 = vector.load %arg10[%c6, %c0_72, %c0_73] : memref<8x8x384xf32, #tpu.memory_space<vmem>>, vector<1x8x384xf32>
    %221 = vector.shape_cast %220 : vector<1x8x384xf32> to vector<8x384xf32>
    %222 = vector.extract_strided_slice %221 {offsets = [0, 0], sizes = [8, 128], strides = [1, 1]} : vector<8x384xf32> to vector<8x128xf32>
    %223 = vector.extract_strided_slice %218 {offsets = [0, 0], sizes = [8, 128], strides = [1, 1]} : vector<8x256xf32> to vector<8x128xf32>
    %224 = arith.addf %222, %223 : vector<8x128xf32>
    %225 = arith.negf %224 : vector<8x128xf32>
    %226 = math.exp %225 : vector<8x128xf32>
    %cst_74 = arith.constant 1.000000e+00 : f32
    %227 = vector.broadcast %cst_74 : f32 to vector<8x128xf32>
    %228 = arith.addf %227, %226 : vector<8x128xf32>
    %229 = arith.divf %227, %228 : vector<8x128xf32>
    %230 = vector.extract_strided_slice %221 {offsets = [0, 128], sizes = [8, 128], strides = [1, 1]} : vector<8x384xf32> to vector<8x128xf32>
    %231 = vector.extract_strided_slice %218 {offsets = [0, 128], sizes = [8, 128], strides = [1, 1]} : vector<8x256xf32> to vector<8x128xf32>
    %232 = arith.addf %230, %231 : vector<8x128xf32>
    %233 = arith.negf %232 : vector<8x128xf32>
    %234 = math.exp %233 : vector<8x128xf32>
    %cst_75 = arith.constant 1.000000e+00 : f32
    %235 = vector.broadcast %cst_75 : f32 to vector<8x128xf32>
    %236 = arith.addf %235, %234 : vector<8x128xf32>
    %237 = arith.divf %235, %236 : vector<8x128xf32>
    %238 = vector.extract_strided_slice %221 {offsets = [0, 256], sizes = [8, 128], strides = [1, 1]} : vector<8x384xf32> to vector<8x128xf32>
    %239 = arith.addf %219, %24 : vector<8x128xf32>
    %240 = arith.mulf %229, %239 : vector<8x128xf32>
    %241 = arith.addf %238, %240 : vector<8x128xf32>
    %242 = math.tanh %241 : vector<8x128xf32>
    %243 = arith.subf %213, %242 : vector<8x128xf32>
    %244 = arith.mulf %237, %243 : vector<8x128xf32>
    %245 = arith.addf %242, %244 : vector<8x128xf32>
    %246 = vector.extract_strided_slice %245 {offsets = [0, 0], sizes = [8, 32], strides = [1, 1]} : vector<8x128xf32> to vector<8x32xf32>
    %c0_76 = arith.constant 0 : index
    %c6_77 = arith.constant 6 : index
    %c0_78 = arith.constant 0 : index
    %247 = vector.load %arg7[%c0_76, %c6_77, %c0_78] : memref<8x8x32xf32, #tpu.memory_space<vmem>>, vector<8x1x32xf32>
    %248 = vector.shape_cast %247 : vector<8x1x32xf32> to vector<8x32xf32>
    %249 = vector.shape_cast %246 : vector<8x32xf32> to vector<8x1x32xf32>
    tpu.vector_store %arg7[%c0_76, %c6_77, %c0_78], %249 {strides = array<i32>} : memref<8x8x32xf32, #tpu.memory_space<vmem>>, vector<8x1x32xf32>,
    %cst_79 = arith.constant dense<0.000000e+00> : vector<8x256xf32>
    %250 = tpu.matmul %245, %20, %cst_79 {dimension_numbers = #tpu.dot_dimension_numbers<[1], [0], [0], [1], [0, 0, 1, 1], [], []>} : vector<8x128xf32>, vector<128x256xf32>, vector<8x256xf32> -> vector<8x256xf32>
    %cst_80 = arith.constant dense<0.000000e+00> : vector<8x128xf32>
    %251 = tpu.matmul %245, %21, %cst_80 {dimension_numbers = #tpu.dot_dimension_numbers<[1], [0], [0], [1], [0, 0, 1, 1], [], []>} : vector<8x128xf32>, vector<128x128xf32>, vector<8x128xf32> -> vector<8x128xf32>
    %c7 = arith.constant 7 : index
    %c0_81 = arith.constant 0 : index
    %c0_82 = arith.constant 0 : index
    %252 = vector.load %arg10[%c7, %c0_81, %c0_82] : memref<8x8x384xf32, #tpu.memory_space<vmem>>, vector<1x8x384xf32>
    %253 = vector.shape_cast %252 : vector<1x8x384xf32> to vector<8x384xf32>
    %254 = vector.extract_strided_slice %253 {offsets = [0, 0], sizes = [8, 128], strides = [1, 1]} : vector<8x384xf32> to vector<8x128xf32>
    %255 = vector.extract_strided_slice %250 {offsets = [0, 0], sizes = [8, 128], strides = [1, 1]} : vector<8x256xf32> to vector<8x128xf32>
    %256 = arith.addf %254, %255 : vector<8x128xf32>
    %257 = arith.negf %256 : vector<8x128xf32>
    %258 = math.exp %257 : vector<8x128xf32>
    %cst_83 = arith.constant 1.000000e+00 : f32
    %259 = vector.broadcast %cst_83 : f32 to vector<8x128xf32>
    %260 = arith.addf %259, %258 : vector<8x128xf32>
    %261 = arith.divf %259, %260 : vector<8x128xf32>
    %262 = vector.extract_strided_slice %253 {offsets = [0, 128], sizes = [8, 128], strides = [1, 1]} : vector<8x384xf32> to vector<8x128xf32>
    %263 = vector.extract_strided_slice %250 {offsets = [0, 128], sizes = [8, 128], strides = [1, 1]} : vector<8x256xf32> to vector<8x128xf32>
    %264 = arith.addf %262, %263 : vector<8x128xf32>
    %265 = arith.negf %264 : vector<8x128xf32>
    %266 = math.exp %265 : vector<8x128xf32>
    %cst_84 = arith.constant 1.000000e+00 : f32
    %267 = vector.broadcast %cst_84 : f32 to vector<8x128xf32>
    %268 = arith.addf %267, %266 : vector<8x128xf32>
    %269 = arith.divf %267, %268 : vector<8x128xf32>
    %270 = vector.extract_strided_slice %253 {offsets = [0, 256], sizes = [8, 128], strides = [1, 1]} : vector<8x384xf32> to vector<8x128xf32>
    %271 = arith.addf %251, %24 : vector<8x128xf32>
    %272 = arith.mulf %261, %271 : vector<8x128xf32>
    %273 = arith.addf %270, %272 : vector<8x128xf32>
    %274 = math.tanh %273 : vector<8x128xf32>
    %275 = arith.subf %245, %274 : vector<8x128xf32>
    %276 = arith.mulf %269, %275 : vector<8x128xf32>
    %277 = arith.addf %274, %276 : vector<8x128xf32>
    %278 = vector.extract_strided_slice %277 {offsets = [0, 0], sizes = [8, 32], strides = [1, 1]} : vector<8x128xf32> to vector<8x32xf32>
    %c0_85 = arith.constant 0 : index
    %c7_86 = arith.constant 7 : index
    %c0_87 = arith.constant 0 : index
    %279 = vector.load %arg7[%c0_85, %c7_86, %c0_87] : memref<8x8x32xf32, #tpu.memory_space<vmem>>, vector<8x1x32xf32>
    %280 = vector.shape_cast %279 : vector<8x1x32xf32> to vector<8x32xf32>
    %281 = vector.shape_cast %278 : vector<8x32xf32> to vector<8x1x32xf32>
    tpu.vector_store %arg7[%c0_85, %c7_86, %c0_87], %281 {strides = array<i32>} : memref<8x8x32xf32, #tpu.memory_space<vmem>>, vector<8x1x32xf32>,
    %c0_88 = arith.constant 0 : index
    %c0_89 = arith.constant 0 : index
    %282 = vector.load %arg9[%c0_88, %c0_89] : memref<8x128xf32, #tpu.memory_space<vmem>>, vector<8x128xf32>
    tpu.vector_store %arg9[%c0_88, %c0_89], %277 {strides = array<i32>} : memref<8x128xf32, #tpu.memory_space<vmem>>, vector<8x128xf32>,
    %283 = vector.extract_strided_slice %277 {offsets = [0, 0], sizes = [8, 32], strides = [1, 1]} : vector<8x128xf32> to vector<8x32xf32>
    %c0_90 = arith.constant 0 : index
    %c0_91 = arith.constant 0 : index
    %284 = vector.load %arg8[%c0_90, %c0_91] : memref<8x32xf32, #tpu.memory_space<vmem>>, vector<8x32xf32>
    tpu.vector_store %arg8[%c0_90, %c0_91], %283 {strides = array<i32>} : memref<8x32xf32, #tpu.memory_space<vmem>>, vector<8x32xf32>,
    return
  }
  func.func @transform_0(%arg0: i32, %arg1: i32) -> (i32, i32, i32) {
    %c0_i32 = arith.constant 0 : i32
    %c0_i32_0 = arith.constant 0 : i32
    return %arg0, %arg1, %c0_i32 : i32, i32, i32
  }
  func.func @transform_1(%arg0: i32, %arg1: i32) -> (i32, i32) {
    %c0_i32 = arith.constant 0 : i32
    %c0_i32_0 = arith.constant 0 : i32
    %c0_i32_1 = arith.constant 0 : i32
    return %c0_i32, %c0_i32_0 : i32, i32
  }
  func.func @transform_2(%arg0: i32, %arg1: i32) -> (i32, i32) {
    %c0_i32 = arith.constant 0 : i32
    %c0_i32_0 = arith.constant 0 : i32
    return %arg0, %c0_i32 : i32, i32
  }
  func.func @transform_3(%arg0: i32, %arg1: i32) -> (i32, i32) {
    %c0_i32 = arith.constant 0 : i32
    %c0_i32_0 = arith.constant 0 : i32
    %c0_i32_1 = arith.constant 0 : i32
    return %c0_i32, %c0_i32_0 : i32, i32
  }
  func.func @transform_4(%arg0: i32, %arg1: i32) -> (i32, i32) {
    %c0_i32 = arith.constant 0 : i32
    %c0_i32_0 = arith.constant 0 : i32
    %c0_i32_1 = arith.constant 0 : i32
    return %c0_i32, %c0_i32_0 : i32, i32
  }
  func.func @transform_5(%arg0: i32, %arg1: i32) -> (i32, i32, i32) {
    %c0_i32 = arith.constant 0 : i32
    %c0_i32_0 = arith.constant 0 : i32
    return %arg0, %arg1, %c0_i32 : i32, i32, i32
  }
  func.func @transform_6(%arg0: i32, %arg1: i32) -> (i32, i32) {
    %c0_i32 = arith.constant 0 : i32
    %c0_i32_0 = arith.constant 0 : i32
    return %arg0, %c0_i32 : i32, i32
  }
}

</mosaic_0001>

<llo_original>
// kernel: encoder_rnn_forward.1
$region0: #{encoder_rnn_forward.1}
  #allocation0 [shape = 'u32[]', space=smem, size = 0x4, offset = 0x4, fixed_abs, tag = 'smem constant byte address 0x4 - core index']
  #allocation1 [shape = 'u32[144,128]{1,0:T(1,128)}', space=vmem, size = 0x12000, scoped, tag = 'internal scratch']
  #allocation2 [shape = 'f32[8,128]{1,0:T(8,128)}', space=vmem, size = 0x1000, scoped, tag = 'scratch operand']
  #allocation3 [shape = 'f32[8,8,384]{2,1,0:T(8,128)}', space=vmem, size = 0x18000, scoped, tag = 'scratch operand']
  %s0 = inlined_call_operand.vmem [shape: s32[1,8,8], index: 0, kind: input, shape index: {}]
  %s1 = inlined_call_operand.vmem [shape: f32[128,384], index: 1, kind: input, shape index: {}]
  %s2 = inlined_call_operand.vmem [shape: f32[8,128], index: 2, kind: input, shape index: {}]
  %s3 = inlined_call_operand.vmem [shape: f32[128,384], index: 3, kind: input, shape index: {}]
  %s4 = inlined_call_operand.vmem [shape: f32[2,384], index: 4, kind: input, shape index: {}]
  %s5 = inlined_call_operand.vmem [shape: f32[8,8,32], index: 5, kind: output, shape index: {0}]
  %s6 = inlined_call_operand.vmem [shape: f32[8,32], index: 6, kind: output, shape index: {1}]
  %7 = xla_tuple %s5, %s6
  %s8 = sld [smem:[#allocation0]]
  $region42: #{encoder_rnn_forward.1} parent=0
    _
  %s10 = ssub.s32 1, %s8
  %s11 = scalar_select 0, %s10, %s8
  // Predicated region
  $region2: #{encoder_rnn_forward.1} parent=0 // pred_check
    _
  $region3: #{encoder_rnn_forward.1} parent=0 // pred_check_branch
    %13 = sbr.rel (0) target = $region5
  $region4: #{encoder_rnn_forward.1} parent=0 // pred_region
    _
  $region5: #{encoder_rnn_forward.1} parent=0 // pred_fallthru
    _
  // Predicated region
  $region6: #{encoder_rnn_forward.1} parent=0 // pred_check
    _
  $region7: #{encoder_rnn_forward.1} parent=0 // pred_check_branch
    %15 = sbr.rel (0) target = $region9
  $region8: #{encoder_rnn_forward.1} parent=0 // pred_region
    _
  $region9: #{encoder_rnn_forward.1} parent=0 // pred_fallthru
    _
  // Predicated region
  $region10: #{encoder_rnn_forward.1} parent=0 // pred_check
    _
  $region11: #{encoder_rnn_forward.1} parent=0 // pred_check_branch
    %17 = sbr.rel (0) target = $region13
  $region12: #{encoder_rnn_forward.1} parent=0 // pred_region
    _
  $region13: #{encoder_rnn_forward.1} parent=0 // pred_fallthru
    _
  // Predicated region
  $region14: #{encoder_rnn_forward.1} parent=0 // pred_check
    _
  $region15: #{encoder_rnn_forward.1} parent=0 // pred_check_branch
    %19 = sbr.rel (0) target = $region17
  $region16: #{encoder_rnn_forward.1} parent=0 // pred_region
    _
  $region17: #{encoder_rnn_forward.1} parent=0 // pred_fallthru
    _
  // Predicated region
  $region18: #{encoder_rnn_forward.1} parent=0 // pred_check
    _
  $region19: #{encoder_rnn_forward.1} parent=0 // pred_check_branch
    %21 = sbr.rel (0) target = $region21
  $region20: #{encoder_rnn_forward.1} parent=0 // pred_region
    _
  $region21: #{encoder_rnn_forward.1} parent=0 // pred_fallthru
    _
  %p22 = scmp.eq.s32.totalorder 0, 0
  // Predicated region
  $region22: #{encoder_rnn_forward.1} parent=0 // pred_check
    %p23 = pneg %p22
  $region23: #{encoder_rnn_forward.1} parent=0 // pred_check_branch
    %25 = sbr.rel (%p23) target = $region25
  $region24: #{encoder_rnn_forward.1} parent=0 // pred_region
    %v26 = vld [vmem:[%s2] sm:$0xff]
    %27 = vst [vmem:[#allocation2] sm:$0xff] %v26
  $region25: #{encoder_rnn_forward.1} parent=0 // pred_fallthru
    _
  %v28 = vld [vmem:[%s0] sm:$0xff]
  %v29 = vlaneseq
  %v30 = vand.u32 %v29, 127
  %v31 = vlaneseq
  %v32 = vshrl.u32 %v31, 7
  %v33 = vsub.s32 0, %v32
  %v34 = vrot.slane %v28, %v33
  %36 = vbcast.lane.b32.xlu0 %v34, 256
  %v37 = vpop.permute.xlu0 %36
  %v38 = vlaneseq
  %v39 = vshrl.u32 %v38, 7
  %v40 = vsub.s32 1, %v39
  %v41 = vrot.slane %v28, %v40
  %43 = vbcast.lane.b32.xlu0 %v41, 256
  %v44 = vpop.permute.xlu0 %43
  %v45 = vlaneseq
  %v46 = vshrl.u32 %v45, 7
  %v47 = vsub.s32 2, %v46
  %v48 = vrot.slane %v28, %v47
  %50 = vbcast.lane.b32.xlu0 %v48, 256
  %v51 = vpop.permute.xlu0 %50
  %v52 = vlaneseq
  %v53 = vshrl.u32 %v52, 7
  %v54 = vsub.s32 3, %v53
  %v55 = vrot.slane %v28, %v54
  %57 = vbcast.lane.b32.xlu0 %v55, 256
  %v58 = vpop.permute.xlu0 %57
  %v59 = vlaneseq
  %v60 = vshrl.u32 %v59, 7
  %v61 = vsub.s32 4, %v60
  %v62 = vrot.slane %v28, %v61
  %64 = vbcast.lane.b32.xlu0 %v62, 256
  %v65 = vpop.permute.xlu0 %64
  %v66 = vlaneseq
  %v67 = vshrl.u32 %v66, 7
  %v68 = vsub.s32 5, %v67
  %v69 = vrot.slane %v28, %v68
  %71 = vbcast.lane.b32.xlu0 %v69, 256
  %v72 = vpop.permute.xlu0 %71
  %v73 = vlaneseq
  %v74 = vshrl.u32 %v73, 7
  %v75 = vsub.s32 6, %v74
  %v76 = vrot.slane %v28, %v75
  %78 = vbcast.lane.b32.xlu0 %v76, 256
  %v79 = vpop.permute.xlu0 %78
  %v80 = vlaneseq
  %v81 = vshrl.u32 %v80, 7
  %v82 = vsub.s32 7, %v81
  %v83 = vrot.slane %v28, %v82
  %85 = vbcast.lane.b32.xlu0 %v83, 256
  %v86 = vpop.permute.xlu0 %85
  %vm87 = vcmp.eq.s32.totalorder %v37, %v30
  %vm88 = vcmp.eq.s32.totalorder %v44, %v30
  %vm89 = vcmp.eq.s32.totalorder %v51, %v30
  %vm90 = vcmp.eq.s32.totalorder %v58, %v30
  %vm91 = vcmp.eq.s32.totalorder %v65, %v30
  %vm92 = vcmp.eq.s32.totalorder %v72, %v30
  %vm93 = vcmp.eq.s32.totalorder %v79, %v30
  %vm94 = vcmp.eq.s32.totalorder %v86, %v30
  %v95 = vsel %vm87, 1, 0
  %v96 = vsel %vm88, 1, 0
  %v97 = vsel %vm89, 1, 0
  %v98 = vsel %vm90, 1, 0
  %v99 = vsel %vm91, 1, 0
  %v100 = vsel %vm92, 1, 0
  %v101 = vsel %vm93, 1, 0
  %v102 = vsel %vm94, 1, 0
  %v103 = vcvt.s32.f32 %v95
  %v104 = vcvt.s32.f32 %v96
  %v105 = vcvt.s32.f32 %v97
  %v106 = vcvt.s32.f32 %v98
  %v107 = vcvt.s32.f32 %v99
  %v108 = vcvt.s32.f32 %v100
  %v109 = vcvt.s32.f32 %v101
  %v110 = vcvt.s32.f32 %v102
  %v111 = vld [vmem:[%s1] sm:$0xff]
  %v112 = vld [vmem:[%s1 + $0x8] sm:$0xff]
  %v113 = vld [vmem:[%s1 + $0x10] sm:$0xff]
  %v114 = vld [vmem:[%s1 + $0x18] sm:$0xff]
  %v115 = vld [vmem:[%s1 + $0x20] sm:$0xff]
  %v116 = vld [vmem:[%s1 + $0x28] sm:$0xff]
  %v117 = vld [vmem:[%s1 + $0x30] sm:$0xff]
  %v118 = vld [vmem:[%s1 + $0x38] sm:$0xff]
  %v119 = vld [vmem:[%s1 + $0x40] sm:$0xff]
  %v120 = vld [vmem:[%s1 + $0x48] sm:$0xff]
  %v121 = vld [vmem:[%s1 + $0x50] sm:$0xff]
  %v122 = vld [vmem:[%s1 + $0x58] sm:$0xff]
  %v123 = vld [vmem:[%s1 + $0x60] sm:$0xff]
  %v124 = vld [vmem:[%s1 + $0x68] sm:$0xff]
  %v125 = vld [vmem:[%s1 + $0x70] sm:$0xff]
  %v126 = vld [vmem:[%s1 + $0x78] sm:$0xff]
  %v127 = vld [vmem:[%s1 + $0x80] sm:$0xff]
  %v128 = vld [vmem:[%s1 + $0x88] sm:$0xff]
  %v129 = vld [vmem:[%s1 + $0x90] sm:$0xff]
  %v130 = vld [vmem:[%s1 + $0x98] sm:$0xff]
  %v131 = vld [vmem:[%s1 + $0xa0] sm:$0xff]
  %v132 = vld [vmem:[%s1 + $0xa8] sm:$0xff]
  %v133 = vld [vmem:[%s1 + $0xb0] sm:$0xff]
  %v134 = vld [vmem:[%s1 + $0xb8] sm:$0xff]
  %v135 = vld [vmem:[%s1 + $0xc0] sm:$0xff]
  %v136 = vld [vmem:[%s1 + $0xc8] sm:$0xff]
  %v137 = vld [vmem:[%s1 + $0xd0] sm:$0xff]
  %v138 = vld [vmem:[%s1 + $0xd8] sm:$0xff]
  %v139 = vld [vmem:[%s1 + $0xe0] sm:$0xff]
  %v140 = vld [vmem:[%s1 + $0xe8] sm:$0xff]
  %v141 = vld [vmem:[%s1 + $0xf0] sm:$0xff]
  %v142 = vld [vmem:[%s1 + $0xf8] sm:$0xff]
  %v143 = vld [vmem:[%s1 + $0x100] sm:$0xff]
  %v144 = vld [vmem:[%s1 + $0x108] sm:$0xff]
  %v145 = vld [vmem:[%s1 + $0x110] sm:$0xff]
  %v146 = vld [vmem:[%s1 + $0x118] sm:$0xff]
  %v147 = vld [vmem:[%s1 + $0x120] sm:$0xff]
  %v148 = vld [vmem:[%s1 + $0x128] sm:$0xff]
  %v149 = vld [vmem:[%s1 + $0x130] sm:$0xff]
  %v150 = vld [vmem:[%s1 + $0x138] sm:$0xff]
  %v151 = vld [vmem:[%s1 + $0x140] sm:$0xff]
  %v152 = vld [vmem:[%s1 + $0x148] sm:$0xff]
  %v153 = vld [vmem:[%s1 + $0x150] sm:$0xff]
  %v154 = vld [vmem:[%s1 + $0x158] sm:$0xff]
  %v155 = vld [vmem:[%s1 + $0x160] sm:$0xff]
  %v156 = vld [vmem:[%s1 + $0x168] sm:$0xff]
  %v157 = vld [vmem:[%s1 + $0x170] sm:$0xff]
  %v158 = vld [vmem:[%s1 + $0x178] sm:$0xff]
  %v159 = vld [vmem:[%s4] ss:$2 sm:$0x7]
  %v161 = vlaneseq
  %v162 = vshrl.u32 %v161, 7
  %v163 = vsub.s32 0, %v162
  %v164 = vrot.slane %v159, %v163
  %v165 = vlaneseq
  %v166 = vshrl.u32 %v165, 7
  %v167 = vsub.s32 1, %v166
  %v168 = vrot.slane %v159, %v167
  %v169 = vlaneseq
  %v170 = vshrl.u32 %v169, 7
  %v171 = vsub.s32 2, %v170
  %v172 = vrot.slane %v159, %v171
  %176 = vmatprep.subr.mxu0 %v112
  %177 = vmatpush1.msra.mxu0 %v111
  %178 = vmatprep.subr.mxu0 %v115
  %179 = vmatpush1.msra.mxu0 %v114
  %180 = vmatprep.subr.mxu0 %v118
  %181 = vmatpush1.msra.mxu0 %v117
  %182 = vmatprep.subr.mxu0 %v121
  %183 = vmatpush1.msra.mxu0 %v120
  %184 = vmatprep.subr.mxu0 %v124
  %185 = vmatpush1.msra.mxu0 %v123
  %186 = vmatprep.subr.mxu0 %v127
  %187 = vmatpush1.msra.mxu0 %v126
  %188 = vmatprep.subr.mxu0 %v130
  %189 = vmatpush1.msra.mxu0 %v129
  %190 = vmatprep.subr.mxu0 %v133
  %191 = vmatpush1.msra.mxu0 %v132
  %192 = vmatprep.subr.mxu0 %v136
  %193 = vmatpush1.msra.mxu0 %v135
  %194 = vmatprep.subr.mxu0 %v139
  %195 = vmatpush1.msra.mxu0 %v138
  %196 = vmatprep.subr.mxu0 %v142
  %197 = vmatpush1.msra.mxu0 %v141
  %198 = vmatprep.subr.mxu0 %v145
  %199 = vmatpush1.msra.mxu0 %v144
  %200 = vmatprep.subr.mxu0 %v148
  %201 = vmatpush1.msra.mxu0 %v147
  %202 = vmatprep.subr.mxu0 %v151
  %203 = vmatpush1.msra.mxu0 %v150
  %204 = vmatprep.subr.mxu0 %v154
  %205 = vmatpush1.msra.mxu0 %v153
  %206 = vmatprep.subr.mxu0 %v157
  %207 = vmatpush1.msra.mxu0 %v156
  %208 = vmatprep.subr.mxu0 0.0
  %209 = vmatpush1.msra.mxu0 0.0
  %210 = vmatprep.subr.mxu0 0.0
  %211 = vmatpush1.msra.mxu0 0.0
  %212 = vmatprep.subr.mxu0 0.0
  %213 = vmatpush1.msra.mxu0 0.0
  %214 = vmatprep.subr.mxu0 0.0
  %215 = vmatpush1.msra.mxu0 0.0
  %216 = vmatprep.subr.mxu0 0.0
  %217 = vmatpush1.msra.mxu0 0.0
  %218 = vmatprep.subr.mxu0 0.0
  %219 = vmatpush1.msra.mxu0 0.0
  %220 = vmatprep.subr.mxu0 0.0
  %221 = vmatpush1.msra.mxu0 0.0
  %222 = vmatprep.subr.mxu0 0.0
  %223 = vmatpush1.msra.mxu0 0.0
  %224 = vmatprep.subr.mxu0 0.0
  %225 = vmatpush1.msra.mxu0 0.0
  %226 = vmatprep.subr.mxu0 0.0
  %227 = vmatpush1.msra.mxu0 0.0
  %228 = vmatprep.subr.mxu0 0.0
  %229 = vmatpush1.msra.mxu0 0.0
  %230 = vmatprep.subr.mxu0 0.0
  %231 = vmatpush1.msra.mxu0 0.0
  %232 = vmatprep.subr.mxu0 0.0
  %233 = vmatpush1.msra.mxu0 0.0
  %234 = vmatprep.subr.mxu0 0.0
  %235 = vmatpush1.msra.mxu0 0.0
  %236 = vmatprep.subr.mxu0 0.0
  %237 = vmatpush1.msra.mxu0 0.0
  %238 = vmatprep.subr.mxu0 0.0
  %239 = vmatpush1.msra.mxu0 0.0
  %240 = vmatprep.mubr.f32.mxu0 0.0
  %241 = vmatmul.mubr.f32.gmra.mrb[0].mxu0 %v103
  %v242 = vpop.f32.mrb[0].mxu0
  %v243 = vadd.f32 %v164, %v242
  %v244 = vpop.f32.mrb[0].mxu0
  %v245 = vadd.f32 %v168, %v244
  %246 = vmatprep.mubr.f32.mxu0 0.0
  %247 = vmatmul.mubr.f32.gmra.mrb[0].mxu0 %v104
  %v248 = vpop.f32.mrb[0].mxu0
  %v249 = vadd.f32 %v164, %v248
  %v250 = vpop.f32.mrb[0].mxu0
  %v251 = vadd.f32 %v168, %v250
  %252 = vmatprep.mubr.f32.mxu0 0.0
  %253 = vmatmul.mubr.f32.gmra.mrb[0].mxu0 %v105
  %v254 = vpop.f32.mrb[0].mxu0
  %v255 = vadd.f32 %v164, %v254
  %v256 = vpop.f32.mrb[0].mxu0
  %v257 = vadd.f32 %v168, %v256
  %258 = vmatprep.mubr.f32.mxu0 0.0
  %259 = vmatmul.mubr.f32.gmra.mrb[0].mxu0 %v106
  %v260 = vpop.f32.mrb[0].mxu0
  %v261 = vadd.f32 %v164, %v260
  %v262 = vpop.f32.mrb[0].mxu0
  %v263 = vadd.f32 %v168, %v262
  %264 = vmatprep.mubr.f32.mxu0 0.0
  %265 = vmatmul.mubr.f32.gmra.mrb[0].mxu0 %v107
  %v266 = vpop.f32.mrb[0].mxu0
  %v267 = vadd.f32 %v164, %v266
  %v268 = vpop.f32.mrb[0].mxu0
  %v269 = vadd.f32 %v168, %v268
  %270 = vmatprep.mubr.f32.mxu0 0.0
  %271 = vmatmul.mubr.f32.gmra.mrb[0].mxu0 %v108
  %v272 = vpop.f32.mrb[0].mxu0
  %v273 = vadd.f32 %v164, %v272
  %v274 = vpop.f32.mrb[0].mxu0
  %v275 = vadd.f32 %v168, %v274
  %276 = vmatprep.mubr.f32.mxu0 0.0
  %277 = vmatmul.mubr.f32.gmra.mrb[0].mxu0 %v109
  %v278 = vpop.f32.mrb[0].mxu0
  %v279 = vadd.f32 %v164, %v278
  %v280 = vpop.f32.mrb[0].mxu0
  %v281 = vadd.f32 %v168, %v280
  %282 = vmatprep.mubr.f32.mxu0 0.0
  %283 = vmatmul.mubr.f32.gmra.mrb[0].mxu0 %v110
  %v284 = vpop.f32.mrb[0].mxu0
  %v285 = vadd.f32 %v164, %v284
  %v286 = vpop.f32.mrb[0].mxu0
  %v287 = vadd.f32 %v168, %v286
  %288 = vdwg.mxu0
  %289 = vmatprep.subr.mxu0 0.0
  %290 = vmatpush1.msra.mxu0 %v113
  %291 = vmatprep.subr.mxu0 0.0
  %292 = vmatpush1.msra.mxu0 %v116
  %293 = vmatprep.subr.mxu0 0.0
  %294 = vmatpush1.msra.mxu0 %v119
  %295 = vmatprep.subr.mxu0 0.0
  %296 = vmatpush1.msra.mxu0 %v122
  %297 = vmatprep.subr.mxu0 0.0
  %298 = vmatpush1.msra.mxu0 %v125
  %299 = vmatprep.subr.mxu0 0.0
  %300 = vmatpush1.msra.mxu0 %v128
  %301 = vmatprep.subr.mxu0 0.0
  %302 = vmatpush1.msra.mxu0 %v131
  %303 = vmatprep.subr.mxu0 0.0
  %304 = vmatpush1.msra.mxu0 %v134
  %305 = vmatprep.subr.mxu0 0.0
  %306 = vmatpush1.msra.mxu0 %v137
  %307 = vmatprep.subr.mxu0 0.0
  %308 = vmatpush1.msra.mxu0 %v140
  %309 = vmatprep.subr.mxu0 0.0
  %310 = vmatpush1.msra.mxu0 %v143
  %311 = vmatprep.subr.mxu0 0.0
  %312 = vmatpush1.msra.mxu0 %v146
  %313 = vmatprep.subr.mxu0 0.0
  %314 = vmatpush1.msra.mxu0 %v149
  %315 = vmatprep.subr.mxu0 0.0
  %316 = vmatpush1.msra.mxu0 %v152
  %317 = vmatprep.subr.mxu0 0.0
  %318 = vmatpush1.msra.mxu0 %v155
  %319 = vmatprep.subr.mxu0 0.0
  %320 = vmatpush1.msra.mxu0 %v158
  %321 = vmatprep.subr.mxu0 0.0
  %322 = vmatpush1.msra.mxu0 0.0
  %323 = vmatprep.subr.mxu0 0.0
  %324 = vmatpush1.msra.mxu0 0.0
  %325 = vmatprep.subr.mxu0 0.0
  %326 = vmatpush1.msra.mxu0 0.0
  %327 = vmatprep.subr.mxu0 0.0
  %328 = vmatpush1.msra.mxu0 0.0
  %329 = vmatprep.subr.mxu0 0.0
  %330 = vmatpush1.msra.mxu0 0.0
  %331 = vmatprep.subr.mxu0 0.0
  %332 = vmatpush1.msra.mxu0 0.0
  %333 = vmatprep.subr.mxu0 0.0
  %334 = vmatpush1.msra.mxu0 0.0
  %335 = vmatprep.subr.mxu0 0.0
  %336 = vmatpush1.msra.mxu0 0.0
  %337 = vmatprep.subr.mxu0 0.0
  %338 = vmatpush1.msra.mxu0 0.0
  %339 = vmatprep.subr.mxu0 0.0
  %340 = vmatpush1.msra.mxu0 0.0
  %341 = vmatprep.subr.mxu0 0.0
  %342 = vmatpush1.msra.mxu0 0.0
  %343 = vmatprep.subr.mxu0 0.0
  %344 = vmatpush1.msra.mxu0 0.0
  %345 = vmatprep.subr.mxu0 0.0
  %346 = vmatpush1.msra.mxu0 0.0
  %347 = vmatprep.subr.mxu0 0.0
  %348 = vmatpush1.msra.mxu0 0.0
  %349 = vmatprep.subr.mxu0 0.0
  %350 = vmatpush1.msra.mxu0 0.0
  %351 = vmatprep.subr.mxu0 0.0
  %352 = vmatpush1.msra.mxu0 0.0
  %353 = vmatprep.mubr.f32.mxu0 0.0
  %354 = vmatmul.mubr.f32.gmra.mrb[0].mxu0 %v103
  %v355 = vpop.f32.mrb[0].mxu0
  %v356 = vadd.f32 %v172, %v355
  %v357 = vpop.f32.mrb[0].mxu0
  %358 = vmatprep.mubr.f32.mxu0 0.0
  %359 = vmatmul.mubr.f32.gmra.mrb[0].mxu0 %v104
  %v360 = vpop.f32.mrb[0].mxu0
  %v361 = vadd.f32 %v172, %v360
  %v362 = vpop.f32.mrb[0].mxu0
  %363 = vmatprep.mubr.f32.mxu0 0.0
  %364 = vmatmul.mubr.f32.gmra.mrb[0].mxu0 %v105
  %v365 = vpop.f32.mrb[0].mxu0
  %v366 = vadd.f32 %v172, %v365
  %v367 = vpop.f32.mrb[0].mxu0
  %368 = vmatprep.mubr.f32.mxu0 0.0
  %369 = vmatmul.mubr.f32.gmra.mrb[0].mxu0 %v106
  %v370 = vpop.f32.mrb[0].mxu0
  %v371 = vadd.f32 %v172, %v370
  %v372 = vpop.f32.mrb[0].mxu0
  %373 = vmatprep.mubr.f32.mxu0 0.0
  %374 = vmatmul.mubr.f32.gmra.mrb[0].mxu0 %v107
  %v375 = vpop.f32.mrb[0].mxu0
  %v376 = vadd.f32 %v172, %v375
  %v377 = vpop.f32.mrb[0].mxu0
  %378 = vmatprep.mubr.f32.mxu0 0.0
  %379 = vmatmul.mubr.f32.gmra.mrb[0].mxu0 %v108
  %v380 = vpop.f32.mrb[0].mxu0
  %v381 = vadd.f32 %v172, %v380
  %v382 = vpop.f32.mrb[0].mxu0
  %383 = vmatprep.mubr.f32.mxu0 0.0
  %384 = vmatmul.mubr.f32.gmra.mrb[0].mxu0 %v109
  %v385 = vpop.f32.mrb[0].mxu0
  %v386 = vadd.f32 %v172, %v385
  %v387 = vpop.f32.mrb[0].mxu0
  %388 = vmatprep.mubr.f32.mxu0 0.0
  %389 = vmatmul.mubr.f32.gmra.mrb[0].mxu0 %v110
  %v390 = vpop.f32.mrb[0].mxu0
  %v391 = vadd.f32 %v172, %v390
  %v392 = vpop.f32.mrb[0].mxu0
  %393 = vdwg.mxu0
  %394 = vst [vmem:[#allocation3] sm:$0xff] %v243
  %395 = vst [vmem:[#allocation3 + $0x8] sm:$0xff] %v245
  %396 = vst [vmem:[#allocation3 + $0x10] sm:$0xff] %v356
  %397 = vst [vmem:[#allocation3 + $0x18] sm:$0xff] %v249
  %398 = vst [vmem:[#allocation3 + $0x20] sm:$0xff] %v251
  %399 = vst [vmem:[#allocation3 + $0x28] sm:$0xff] %v361
  %400 = vst [vmem:[#allocation3 + $0x30] sm:$0xff] %v255
  %401 = vst [vmem:[#allocation3 + $0x38] sm:$0xff] %v257
  %402 = vst [vmem:[#allocation3 + $0x40] sm:$0xff] %v366
  %403 = vst [vmem:[#allocation3 + $0x48] sm:$0xff] %v261
  %404 = vst [vmem:[#allocation3 + $0x50] sm:$0xff] %v263
  %405 = vst [vmem:[#allocation3 + $0x58] sm:$0xff] %v371
  %406 = vst [vmem:[#allocation3 + $0x60] sm:$0xff] %v267
  %407 = vst [vmem:[#allocation3 + $0x68] sm:$0xff] %v269
  %408 = vst [vmem:[#allocation3 + $0x70] sm:$0xff] %v376
  %409 = vst [vmem:[#allocation3 + $0x78] sm:$0xff] %v273
  %410 = vst [vmem:[#allocation3 + $0x80] sm:$0xff] %v275
  %411 = vst [vmem:[#allocation3 + $0x88] sm:$0xff] %v381
  %412 = vst [vmem:[#allocation3 + $0x90] sm:$0xff] %v279
  %413 = vst [vmem:[#allocation3 + $0x98] sm:$0xff] %v281
  %414 = vst [vmem:[#allocation3 + $0xa0] sm:$0xff] %v386
  %415 = vst [vmem:[#allocation3 + $0xa8] sm:$0xff] %v285
  %416 = vst [vmem:[#allocation3 + $0xb0] sm:$0xff] %v287
  %417 = vst [vmem:[#allocation3 + $0xb8] sm:$0xff] %v391
  %v418 = vld [vmem:[%s3] sm:$0xff]
  %v419 = vld [vmem:[%s3 + $0x8] sm:$0xff]
  %v420 = vld [vmem:[%s3 + $0x10] sm:$0xff]
  %v421 = vld [vmem:[%s3 + $0x18] sm:$0xff]
  %v422 = vld [vmem:[%s3 + $0x20] sm:$0xff]
  %v423 = vld [vmem:[%s3 + $0x28] sm:$0xff]
  %v424 = vld [vmem:[%s3 + $0x30] sm:$0xff]
  %v425 = vld [vmem:[%s3 + $0x38] sm:$0xff]
  %v426 = vld [vmem:[%s3 + $0x40] sm:$0xff]
  %v427 = vld [vmem:[%s3 + $0x48] sm:$0xff]
  %v428 = vld [vmem:[%s3 + $0x50] sm:$0xff]
  %v429 = vld [vmem:[%s3 + $0x58] sm:$0xff]
  %v430 = vld [vmem:[%s3 + $0x60] sm:$0xff]
  %v431 = vld [vmem:[%s3 + $0x68] sm:$0xff]
  %v432 = vld [vmem:[%s3 + $0x70] sm:$0xff]
  %v433 = vld [vmem:[%s3 + $0x78] sm:$0xff]
  %v434 = vld [vmem:[%s3 + $0x80] sm:$0xff]
  %v435 = vld [vmem:[%s3 + $0x88] sm:$0xff]
  %v436 = vld [vmem:[%s3 + $0x90] sm:$0xff]
  %v437 = vld [vmem:[%s3 + $0x98] sm:$0xff]
  %v438 = vld [vmem:[%s3 + $0xa0] sm:$0xff]
  %v439 = vld [vmem:[%s3 + $0xa8] sm:$0xff]
  %v440 = vld [vmem:[%s3 + $0xb0] sm:$0xff]
  %v441 = vld [vmem:[%s3 + $0xb8] sm:$0xff]
  %v442 = vld [vmem:[%s3 + $0xc0] sm:$0xff]
  %v443 = vld [vmem:[%s3 + $0xc8] sm:$0xff]
  %v444 = vld [vmem:[%s3 + $0xd0] sm:$0xff]
  %v445 = vld [vmem:[%s3 + $0xd8] sm:$0xff]
  %v446 = vld [vmem:[%s3 + $0xe0] sm:$0xff]
  %v447 = vld [vmem:[%s3 + $0xe8] sm:$0xff]
  %v448 = vld [vmem:[%s3 + $0xf0] sm:$0xff]
  %v449 = vld [vmem:[%s3 + $0xf8] sm:$0xff]
  %v450 = vld [vmem:[%s3 + $0x100] sm:$0xff]
  %v451 = vld [vmem:[%s3 + $0x108] sm:$0xff]
  %v452 = vld [vmem:[%s3 + $0x110] sm:$0xff]
  %v453 = vld [vmem:[%s3 + $0x118] sm:$0xff]
  %v454 = vld [vmem:[%s3 + $0x120] sm:$0xff]
  %v455 = vld [vmem:[%s3 + $0x128] sm:$0xff]
  %v456 = vld [vmem:[%s3 + $0x130] sm:$0xff]
  %v457 = vld [vmem:[%s3 + $0x138] sm:$0xff]
  %v458 = vld [vmem:[%s3 + $0x140] sm:$0xff]
  %v459 = vld [vmem:[%s3 + $0x148] sm:$0xff]
  %v460 = vld [vmem:[%s3 + $0x150] sm:$0xff]
  %v461 = vld [vmem:[%s3 + $0x158] sm:$0xff]
  %v462 = vld [vmem:[%s3 + $0x160] sm:$0xff]
  %v463 = vld [vmem:[%s3 + $0x168] sm:$0xff]
  %v464 = vld [vmem:[%s3 + $0x170] sm:$0xff]
  %v465 = vld [vmem:[%s3 + $0x178] sm:$0xff]
  %v466 = vld [vmem:[%s4 + $0x5] sm:$0x1]
  %v467 = vlaneseq
  %v468 = vshrl.u32 %v467, 7
  %v469 = vsub.s32 0, %v468
  %v470 = vrot.slane %v466, %v469
  %v471 = vld [vmem:[#allocation2] sm:$0xff]
  %472 = vmatprep.subr.mxu0 %v419
  %473 = vmatpush1.msra.mxu0 %v418
  %474 = vmatprep.subr.mxu0 %v422
  %475 = vmatpush1.msra.mxu0 %v421
  %476 = vmatprep.subr.mxu0 %v425
  %477 = vmatpush1.msra.mxu0 %v424
  %478 = vmatprep.subr.mxu0 %v428
  %479 = vmatpush1.msra.mxu0 %v427
  %480 = vmatprep.subr.mxu0 %v431
  %481 = vmatpush1.msra.mxu0 %v430
  %482 = vmatprep.subr.mxu0 %v434
  %483 = vmatpush1.msra.mxu0 %v433
  %484 = vmatprep.subr.mxu0 %v437
  %485 = vmatpush1.msra.mxu0 %v436
  %486 = vmatprep.subr.mxu0 %v440
  %487 = vmatpush1.msra.mxu0 %v439
  %488 = vmatprep.subr.mxu0 %v443
  %489 = vmatpush1.msra.mxu0 %v442
  %490 = vmatprep.subr.mxu0 %v446
  %491 = vmatpush1.msra.mxu0 %v445
  %492 = vmatprep.subr.mxu0 %v449
  %493 = vmatpush1.msra.mxu0 %v448
  %494 = vmatprep.subr.mxu0 %v452
  %495 = vmatpush1.msra.mxu0 %v451
  %496 = vmatprep.subr.mxu0 %v455
  %497 = vmatpush1.msra.mxu0 %v454
  %498 = vmatprep.subr.mxu0 %v458
  %499 = vmatpush1.msra.mxu0 %v457
  %500 = vmatprep.subr.mxu0 %v461
  %501 = vmatpush1.msra.mxu0 %v460
  %502 = vmatprep.subr.mxu0 %v464
  %503 = vmatpush1.msra.mxu0 %v463
  %504 = vmatprep.subr.mxu0 0.0
  %505 = vmatpush1.msra.mxu0 0.0
  %506 = vmatprep.subr.mxu0 0.0
  %507 = vmatpush1.msra.mxu0 0.0
  %508 = vmatprep.subr.mxu0 0.0
  %509 = vmatpush1.msra.mxu0 0.0
  %510 = vmatprep.subr.mxu0 0.0
  %511 = vmatpush1.msra.mxu0 0.0
  %512 = vmatprep.subr.mxu0 0.0
  %513 = vmatpush1.msra.mxu0 0.0
  %514 = vmatprep.subr.mxu0 0.0
  %515 = vmatpush1.msra.mxu0 0.0
  %516 = vmatprep.subr.mxu0 0.0
  %517 = vmatpush1.msra.mxu0 0.0
  %518 = vmatprep.subr.mxu0 0.0
  %519 = vmatpush1.msra.mxu0 0.0
  %520 = vmatprep.subr.mxu0 0.0
  %521 = vmatpush1.msra.mxu0 0.0
  %522 = vmatprep.subr.mxu0 0.0
  %523 = vmatpush1.msra.mxu0 0.0
  %524 = vmatprep.subr.mxu0 0.0
  %525 = vmatpush1.msra.mxu0 0.0
  %526 = vmatprep.subr.mxu0 0.0
  %527 = vmatpush1.msra.mxu0 0.0
  %528 = vmatprep.subr.mxu0 0.0
  %529 = vmatpush1.msra.mxu0 0.0
  %530 = vmatprep.subr.mxu0 0.0
  %531 = vmatpush1.msra.mxu0 0.0
  %532 = vmatprep.subr.mxu0 0.0
  %533 = vmatpush1.msra.mxu0 0.0
  %534 = vmatprep.subr.mxu0 0.0
  %535 = vmatpush1.msra.mxu0 0.0
  %536 = vmatprep.mubr.f32.mxu0 0.0
  %537 = vmatmul.mubr.f32.gmra.mrb[0].mxu0 %v471
  %v538 = vpop.f32.mrb[0].mxu0
  %v539 = vadd.f32 0.0, %v538
  %v540 = vpop.f32.mrb[0].mxu0
  %v541 = vadd.f32 0.0, %v540
  %542 = vdwg.mxu0
  %v543 = vld [vmem:[#allocation3] sm:$0xff]
  %v544 = vld [vmem:[#allocation3 + $0x8] sm:$0xff]
  %v545 = vld [vmem:[#allocation3 + $0x10] sm:$0xff]
  %v546 = vadd.f32 %v543, %v539
  %v547 = vxor.u32 %v546, 2147483648
  %v548 = vmul.f32 %v547, 1.442695
  %v549 = vpow.pop %v548
  %v550 = vadd.f32 %v549, 1.0
  %v551 = vrcp.pop %v550
  %v552 = vmul.f32 1.0, %v551
  %v553 = vadd.f32 %v544, %v541
  %v554 = vxor.u32 %v553, 2147483648
  %v555 = vmul.f32 %v554, 1.442695
  %v556 = vpow.pop %v555
  %v557 = vadd.f32 %v556, 1.0
  %v558 = vrcp.pop %v557
  %v559 = vmul.f32 1.0, %v558
  %560 = vmatprep.subr.mxu0 0.0
  %561 = vmatpush1.msra.mxu0 %v420
  %562 = vmatprep.subr.mxu0 0.0
  %563 = vmatpush1.msra.mxu0 %v423
  %564 = vmatprep.subr.mxu0 0.0
  %565 = vmatpush1.msra.mxu0 %v426
  %566 = vmatprep.subr.mxu0 0.0
  %567 = vmatpush1.msra.mxu0 %v429
  %568 = vmatprep.subr.mxu0 0.0
  %569 = vmatpush1.msra.mxu0 %v432
  %570 = vmatprep.subr.mxu0 0.0
  %571 = vmatpush1.msra.mxu0 %v435
  %572 = vmatprep.subr.mxu0 0.0
  %573 = vmatpush1.msra.mxu0 %v438
  %574 = vmatprep.subr.mxu0 0.0
  %575 = vmatpush1.msra.mxu0 %v441
  %576 = vmatprep.subr.mxu0 0.0
  %577 = vmatpush1.msra.mxu0 %v444
  %578 = vmatprep.subr.mxu0 0.0
  %579 = vmatpush1.msra.mxu0 %v447
  %580 = vmatprep.subr.mxu0 0.0
  %581 = vmatpush1.msra.mxu0 %v450
  %582 = vmatprep.subr.mxu0 0.0
  %583 = vmatpush1.msra.mxu0 %v453
  %584 = vmatprep.subr.mxu0 0.0
  %585 = vmatpush1.msra.mxu0 %v456
  %586 = vmatprep.subr.mxu0 0.0
  %587 = vmatpush1.msra.mxu0 %v459
  %588 = vmatprep.subr.mxu0 0.0
  %589 = vmatpush1.msra.mxu0 %v462
  %590 = vmatprep.subr.mxu0 0.0
  %591 = vmatpush1.msra.mxu0 %v465
  %592 = vmatprep.subr.mxu0 0.0
  %593 = vmatpush1.msra.mxu0 0.0
  %594 = vmatprep.subr.mxu0 0.0
  %595 = vmatpush1.msra.mxu0 0.0
  %596 = vmatprep.subr.mxu0 0.0
  %597 = vmatpush1.msra.mxu0 0.0
  %598 = vmatprep.subr.mxu0 0.0
  %599 = vmatpush1.msra.mxu0 0.0
  %600 = vmatprep.subr.mxu0 0.0
  %601 = vmatpush1.msra.mxu0 0.0
  %602 = vmatprep.subr.mxu0 0.0
  %603 = vmatpush1.msra.mxu0 0.0
  %604 = vmatprep.subr.mxu0 0.0
  %605 = vmatpush1.msra.mxu0 0.0
  %606 = vmatprep.subr.mxu0 0.0
  %607 = vmatpush1.msra.mxu0 0.0
  %608 = vmatprep.subr.mxu0 0.0
  %609 = vmatpush1.msra.mxu0 0.0
  %610 = vmatprep.subr.mxu0 0.0
  %611 = vmatpush1.msra.mxu0 0.0
  %612 = vmatprep.subr.mxu0 0.0
  %613 = vmatpush1.msra.mxu0 0.0
  %614 = vmatprep.subr.mxu0 0.0
  %615 = vmatpush1.msra.mxu0 0.0
  %616 = vmatprep.subr.mxu0 0.0
  %617 = vmatpush1.msra.mxu0 0.0
  %618 = vmatprep.subr.mxu0 0.0
  %619 = vmatpush1.msra.mxu0 0.0
  %620 = vmatprep.subr.mxu0 0.0
  %621 = vmatpush1.msra.mxu0 0.0
  %622 = vmatprep.subr.mxu0 0.0
  %623 = vmatpush1.msra.mxu0 0.0
  %624 = vmatprep.mubr.f32.mxu0 0.0
  %625 = vmatmul.mubr.f32.gmra.mrb[0].mxu0 %v471
  %v626 = vpop.f32.mrb[0].mxu0
  %v627 = vadd.f32 %v470, %v626
  %v628 = vpop.f32.mrb[0].mxu0
  %629 = vdwg.mxu0
  %v630 = vmul.f32 %v552, %v627
  %v631 = vadd.f32 %v545, %v630
  %v632 = vtanh.pop %v631
  %v633 = vsub.f32 %v471, %v632
  %v634 = vmul.f32 %v559, %v633
  %v635 = vadd.f32 %v632, %v634
  %v637 = vcombine.high %v635, %v635
  %v639 = vunpack.c.l.s4 1966171168
  %v640 = vunpack.c.0.s8 %v639
  %v641 = vlaneseq
  %v642 = vshrl.u32 %v641, 7
  %v643 = vsub.s32 %v640, %v642
  %v644 = vrot.slane %v635, %v643
  %v646 = vunpack.c.l.s4 1966171168
  %v647 = vunpack.c.0.s8 %v646
  %v648 = vlaneseq
  %v649 = vshrl.u32 %v648, 7
  %v650 = vsub.s32 %v647, %v649
  %v651 = vrot.slane %v637, %v650
  %v652 = vcombine.high %v644, %v644
  %v653 = vcombine.high %v651, %v651
  %v655 = vunpack.c.l.s4 1966171168
  %v656 = vunpack.c.0.s8 %v655
  %v657 = vlaneseq
  %v658 = vshrl.u32 %v657, 7
  %v659 = vsub.s32 %v656, %v658
  %v660 = vrot.slane %v644, %v659
  %v662 = vunpack.c.l.s4 1966171168
  %v663 = vunpack.c.0.s8 %v662
  %v664 = vlaneseq
  %v665 = vshrl.u32 %v664, 7
  %v666 = vsub.s32 %v663, %v665
  %v667 = vrot.slane %v651, %v666
  %v669 = vunpack.c.l.s4 1966171168
  %v670 = vunpack.c.0.s8 %v669
  %v671 = vlaneseq
  %v672 = vshrl.u32 %v671, 7
  %v673 = vsub.s32 %v670, %v672
  %v674 = vrot.slane %v652, %v673
  %v676 = vunpack.c.l.s4 1966171168
  %v677 = vunpack.c.0.s8 %v676
  %v678 = vlaneseq
  %v679 = vshrl.u32 %v678, 7
  %v680 = vsub.s32 %v677, %v679
  %v681 = vrot.slane %v653, %v680
  %v682 = vcombine.high %v660, %v660
  %v683 = vcombine.high %v667, %v667
  %v684 = vcombine.high %v674, %v674
  %v685 = vcombine.high %v681, %v681
  %vm694 = vcmask 253952
  %695 = vst.msk [vmem:[%s5] sm:$0x1] %vm694, %v660
  %696 = vst.msk [vmem:[%s5 + $0x8] sm:$0x1] %vm694, %v674
  %697 = vst.msk [vmem:[%s5 + $0x10] sm:$0x1] %vm694, %v682
  %698 = vst.msk [vmem:[%s5 + $0x18] sm:$0x1] %vm694, %v684
  %699 = vst.msk [vmem:[%s5 + $0x20] sm:$0x1] %vm694, %v667
  %700 = vst.msk [vmem:[%s5 + $0x28] sm:$0x1] %vm694, %v681
  %701 = vst.msk [vmem:[%s5 + $0x30] sm:$0x1] %vm694, %v683
  %702 = vst.msk [vmem:[%s5 + $0x38] sm:$0x1] %vm694, %v685
  %703 = vmatprep.subr.mxu0 %v419
  %704 = vmatpush1.msra.mxu0 %v418
  %705 = vmatprep.subr.mxu0 %v422
  %706 = vmatpush1.msra.mxu0 %v421
  %707 = vmatprep.subr.mxu0 %v425
  %708 = vmatpush1.msra.mxu0 %v424
  %709 = vmatprep.subr.mxu0 %v428
  %710 = vmatpush1.msra.mxu0 %v427
  %711 = vmatprep.subr.mxu0 %v431
  %712 = vmatpush1.msra.mxu0 %v430
  %713 = vmatprep.subr.mxu0 %v434
  %714 = vmatpush1.msra.mxu0 %v433
  %715 = vmatprep.subr.mxu0 %v437
  %716 = vmatpush1.msra.mxu0 %v436
  %717 = vmatprep.subr.mxu0 %v440
  %718 = vmatpush1.msra.mxu0 %v439
  %719 = vmatprep.subr.mxu0 %v443
  %720 = vmatpush1.msra.mxu0 %v442
  %721 = vmatprep.subr.mxu0 %v446
  %722 = vmatpush1.msra.mxu0 %v445
  %723 = vmatprep.subr.mxu0 %v449
  %724 = vmatpush1.msra.mxu0 %v448
  %725 = vmatprep.subr.mxu0 %v452
  %726 = vmatpush1.msra.mxu0 %v451
  %727 = vmatprep.subr.mxu0 %v455
  %728 = vmatpush1.msra.mxu0 %v454
  %729 = vmatprep.subr.mxu0 %v458
  %730 = vmatpush1.msra.mxu0 %v457
  %731 = vmatprep.subr.mxu0 %v461
  %732 = vmatpush1.msra.mxu0 %v460
  %733 = vmatprep.subr.mxu0 %v464
  %734 = vmatpush1.msra.mxu0 %v463
  %735 = vmatprep.subr.mxu0 0.0
  %736 = vmatpush1.msra.mxu0 0.0
  %737 = vmatprep.subr.mxu0 0.0
  %738 = vmatpush1.msra.mxu0 0.0
  %739 = vmatprep.subr.mxu0 0.0
  %740 = vmatpush1.msra.mxu0 0.0
  %741 = vmatprep.subr.mxu0 0.0
  %742 = vmatpush1.msra.mxu0 0.0
  %743 = vmatprep.subr.mxu0 0.0
  %744 = vmatpush1.msra.mxu0 0.0
  %745 = vmatprep.subr.mxu0 0.0
  %746 = vmatpush1.msra.mxu0 0.0
  %747 = vmatprep.subr.mxu0 0.0
  %748 = vmatpush1.msra.mxu0 0.0
  %749 = vmatprep.subr.mxu0 0.0
  %750 = vmatpush1.msra.mxu0 0.0
  %751 = vmatprep.subr.mxu0 0.0
  %752 = vmatpush1.msra.mxu0 0.0
  %753 = vmatprep.subr.mxu0 0.0
  %754 = vmatpush1.msra.mxu0 0.0
  %755 = vmatprep.subr.mxu0 0.0
  %756 = vmatpush1.msra.mxu0 0.0
  %757 = vmatprep.subr.mxu0 0.0
  %758 = vmatpush1.msra.mxu0 0.0
  %759 = vmatprep.subr.mxu0 0.0
  %760 = vmatpush1.msra.mxu0 0.0
  %761 = vmatprep.subr.mxu0 0.0
  %762 = vmatpush1.msra.mxu0 0.0
  %763 = vmatprep.subr.mxu0 0.0
  %764 = vmatpush1.msra.mxu0 0.0
  %765 = vmatprep.subr.mxu0 0.0
  %766 = vmatpush1.msra.mxu0 0.0
  %767 = vmatprep.mubr.f32.mxu0 0.0
  %768 = vmatmul.mubr.f32.gmra.mrb[0].mxu0 %v635
  %v769 = vpop.f32.mrb[0].mxu0
  %v770 = vadd.f32 0.0, %v769
  %v771 = vpop.f32.mrb[0].mxu0
  %v772 = vadd.f32 0.0, %v771
  %773 = vdwg.mxu0
  %s774 = scalar_lea.vmem [#allocation3], 24
  %v775 = vld [vmem:[%s774] sm:$0xff]
  %v776 = vld [vmem:[%s774 + $0x8] sm:$0xff]
  %v777 = vld [vmem:[%s774 + $0x10] sm:$0xff]
  %v778 = vadd.f32 %v775, %v770
  %v779 = vxor.u32 %v778, 2147483648
  %v780 = vmul.f32 %v779, 1.442695
  %v781 = vpow.pop %v780
  %v782 = vadd.f32 %v781, 1.0
  %v783 = vrcp.pop %v782
  %v784 = vmul.f32 1.0, %v783
  %v785 = vadd.f32 %v776, %v772
  %v786 = vxor.u32 %v785, 2147483648
  %v787 = vmul.f32 %v786, 1.442695
  %v788 = vpow.pop %v787
  %v789 = vadd.f32 %v788, 1.0
  %v790 = vrcp.pop %v789
  %v791 = vmul.f32 1.0, %v790
  %792 = vmatprep.subr.mxu0 0.0
  %793 = vmatpush1.msra.mxu0 %v420
  %794 = vmatprep.subr.mxu0 0.0
  %795 = vmatpush1.msra.mxu0 %v423
  %796 = vmatprep.subr.mxu0 0.0
  %797 = vmatpush1.msra.mxu0 %v426
  %798 = vmatprep.subr.mxu0 0.0
  %799 = vmatpush1.msra.mxu0 %v429
  %800 = vmatprep.subr.mxu0 0.0
  %801 = vmatpush1.msra.mxu0 %v432
  %802 = vmatprep.subr.mxu0 0.0
  %803 = vmatpush1.msra.mxu0 %v435
  %804 = vmatprep.subr.mxu0 0.0
  %805 = vmatpush1.msra.mxu0 %v438
  %806 = vmatprep.subr.mxu0 0.0
  %807 = vmatpush1.msra.mxu0 %v441
  %808 = vmatprep.subr.mxu0 0.0
  %809 = vmatpush1.msra.mxu0 %v444
  %810 = vmatprep.subr.mxu0 0.0
  %811 = vmatpush1.msra.mxu0 %v447
  %812 = vmatprep.subr.mxu0 0.0
  %813 = vmatpush1.msra.mxu0 %v450
  %814 = vmatprep.subr.mxu0 0.0
  %815 = vmatpush1.msra.mxu0 %v453
  %816 = vmatprep.subr.mxu0 0.0
  %817 = vmatpush1.msra.mxu0 %v456
  %818 = vmatprep.subr.mxu0 0.0
  %819 = vmatpush1.msra.mxu0 %v459
  %820 = vmatprep.subr.mxu0 0.0
  %821 = vmatpush1.msra.mxu0 %v462
  %822 = vmatprep.subr.mxu0 0.0
  %823 = vmatpush1.msra.mxu0 %v465
  %824 = vmatprep.subr.mxu0 0.0
  %825 = vmatpush1.msra.mxu0 0.0
  %826 = vmatprep.subr.mxu0 0.0
  %827 = vmatpush1.msra.mxu0 0.0
  %828 = vmatprep.subr.mxu0 0.0
  %829 = vmatpush1.msra.mxu0 0.0
  %830 = vmatprep.subr.mxu0 0.0
  %831 = vmatpush1.msra.mxu0 0.0
  %832 = vmatprep.subr.mxu0 0.0
  %833 = vmatpush1.msra.mxu0 0.0
  %834 = vmatprep.subr.mxu0 0.0
  %835 = vmatpush1.msra.mxu0 0.0
  %836 = vmatprep.subr.mxu0 0.0
  %837 = vmatpush1.msra.mxu0 0.0
  %838 = vmatprep.subr.mxu0 0.0
  %839 = vmatpush1.msra.mxu0 0.0
  %840 = vmatprep.subr.mxu0 0.0
  %841 = vmatpush1.msra.mxu0 0.0
  %842 = vmatprep.subr.mxu0 0.0
  %843 = vmatpush1.msra.mxu0 0.0
  %844 = vmatprep.subr.mxu0 0.0
  %845 = vmatpush1.msra.mxu0 0.0
  %846 = vmatprep.subr.mxu0 0.0
  %847 = vmatpush1.msra.mxu0 0.0
  %848 = vmatprep.subr.mxu0 0.0
  %849 = vmatpush1.msra.mxu0 0.0
  %850 = vmatprep.subr.mxu0 0.0
  %851 = vmatpush1.msra.mxu0 0.0
  %852 = vmatprep.subr.mxu0 0.0
  %853 = vmatpush1.msra.mxu0 0.0
  %854 = vmatprep.subr.mxu0 0.0
  %855 = vmatpush1.msra.mxu0 0.0
  %856 = vmatprep.mubr.f32.mxu0 0.0
  %857 = vmatmul.mubr.f32.gmra.mrb[0].mxu0 %v635
  %v858 = vpop.f32.mrb[0].mxu0
  %v859 = vadd.f32 %v470, %v858
  %v860 = vpop.f32.mrb[0].mxu0
  %861 = vdwg.mxu0
  %v862 = vmul.f32 %v784, %v859
  %v863 = vadd.f32 %v777, %v862
  %v864 = vtanh.pop %v863
  %v865 = vsub.f32 %v635, %v864
  %v866 = vmul.f32 %v791, %v865
  %v867 = vadd.f32 %v864, %v866
  %v869 = vcombine.high %v867, %v867
  %v871 = vunpack.c.l.s4 1966171168
  %v872 = vunpack.c.0.s8 %v871
  %v873 = vlaneseq
  %v874 = vshrl.u32 %v873, 7
  %v875 = vsub.s32 %v872, %v874
  %v876 = vrot.slane %v867, %v875
  %v878 = vunpack.c.l.s4 1966171168
  %v879 = vunpack.c.0.s8 %v878
  %v880 = vlaneseq
  %v881 = vshrl.u32 %v880, 7
  %v882 = vsub.s32 %v879, %v881
  %v883 = vrot.slane %v869, %v882
  %v884 = vcombine.high %v876, %v876
  %v885 = vcombine.high %v883, %v883
  %v887 = vunpack.c.l.s4 1966171168
  %v888 = vunpack.c.0.s8 %v887
  %v889 = vlaneseq
  %v890 = vshrl.u32 %v889, 7
  %v891 = vsub.s32 %v888, %v890
  %v892 = vrot.slane %v876, %v891
  %v894 = vunpack.c.l.s4 1966171168
  %v895 = vunpack.c.0.s8 %v894
  %v896 = vlaneseq
  %v897 = vshrl.u32 %v896, 7
  %v898 = vsub.s32 %v895, %v897
  %v899 = vrot.slane %v883, %v898
  %v901 = vunpack.c.l.s4 1966171168
  %v902 = vunpack.c.0.s8 %v901
  %v903 = vlaneseq
  %v904 = vshrl.u32 %v903, 7
  %v905 = vsub.s32 %v902, %v904
  %v906 = vrot.slane %v884, %v905
  %v908 = vunpack.c.l.s4 1966171168
  %v909 = vunpack.c.0.s8 %v908
  %v910 = vlaneseq
  %v911 = vshrl.u32 %v910, 7
  %v912 = vsub.s32 %v909, %v911
  %v913 = vrot.slane %v885, %v912
  %v914 = vcombine.high %v892, %v892
  %v915 = vcombine.high %v899, %v899
  %v916 = vcombine.high %v906, %v906
  %v917 = vcombine.high %v913, %v913
  %926 = vst.msk [vmem:[%s5 + $0x1] sm:$0x1] %vm694, %v892
  %927 = vst.msk [vmem:[%s5 + $0x9] sm:$0x1] %vm694, %v906
  %928 = vst.msk [vmem:[%s5 + $0x11] sm:$0x1] %vm694, %v914
  %929 = vst.msk [vmem:[%s5 + $0x19] sm:$0x1] %vm694, %v916
  %930 = vst.msk [vmem:[%s5 + $0x21] sm:$0x1] %vm694, %v899
  %931 = vst.msk [vmem:[%s5 + $0x29] sm:$0x1] %vm694, %v913
  %932 = vst.msk [vmem:[%s5 + $0x31] sm:$0x1] %vm694, %v915
  %933 = vst.msk [vmem:[%s5 + $0x39] sm:$0x1] %vm694, %v917
  %934 = vmatprep.subr.mxu0 %v419
  %935 = vmatpush1.msra.mxu0 %v418
  %936 = vmatprep.subr.mxu0 %v422
  %937 = vmatpush1.msra.mxu0 %v421
  %938 = vmatprep.subr.mxu0 %v425
  %939 = vmatpush1.msra.mxu0 %v424
  %940 = vmatprep.subr.mxu0 %v428
  %941 = vmatpush1.msra.mxu0 %v427
  %942 = vmatprep.subr.mxu0 %v431
  %943 = vmatpush1.msra.mxu0 %v430
  %944 = vmatprep.subr.mxu0 %v434
  %945 = vmatpush1.msra.mxu0 %v433
  %946 = vmatprep.subr.mxu0 %v437
  %947 = vmatpush1.msra.mxu0 %v436
  %948 = vmatprep.subr.mxu0 %v440
  %949 = vmatpush1.msra.mxu0 %v439
  %950 = vmatprep.subr.mxu0 %v443
  %951 = vmatpush1.msra.mxu0 %v442
  %952 = vmatprep.subr.mxu0 %v446
  %953 = vmatpush1.msra.mxu0 %v445
  %954 = vmatprep.subr.mxu0 %v449
  %955 = vmatpush1.msra.mxu0 %v448
  %956 = vmatprep.subr.mxu0 %v452
  %957 = vmatpush1.msra.mxu0 %v451
  %958 = vmatprep.subr.mxu0 %v455
  %959 = vmatpush1.msra.mxu0 %v454
  %960 = vmatprep.subr.mxu0 %v458
  %961 = vmatpush1.msra.mxu0 %v457
  %962 = vmatprep.subr.mxu0 %v461
  %963 = vmatpush1.msra.mxu0 %v460
  %964 = vmatprep.subr.mxu0 %v464
  %965 = vmatpush1.msra.mxu0 %v463
  %966 = vmatprep.subr.mxu0 0.0
  %967 = vmatpush1.msra.mxu0 0.0
  %968 = vmatprep.subr.mxu0 0.0
  %969 = vmatpush1.msra.mxu0 0.0
  %970 = vmatprep.subr.mxu0 0.0
  %971 = vmatpush1.msra.mxu0 0.0
  %972 = vmatprep.subr.mxu0 0.0
  %973 = vmatpush1.msra.mxu0 0.0
  %974 = vmatprep.subr.mxu0 0.0
  %975 = vmatpush1.msra.mxu0 0.0
  %976 = vmatprep.subr.mxu0 0.0
  %977 = vmatpush1.msra.mxu0 0.0
  %978 = vmatprep.subr.mxu0 0.0
  %979 = vmatpush1.msra.mxu0 0.0
  %980 = vmatprep.subr.mxu0 0.0
  %981 = vmatpush1.msra.mxu0 0.0
  %982 = vmatprep.subr.mxu0 0.0
  %983 = vmatpush1.msra.mxu0 0.0
  %984 = vmatprep.subr.mxu0 0.0
  %985 = vmatpush1.msra.mxu0 0.0
  %986 = vmatprep.subr.mxu0 0.0
  %987 = vmatpush1.msra.mxu0 0.0
  %988 = vmatprep.subr.mxu0 0.0
  %989 = vmatpush1.msra.mxu0 0.0
  %990 = vmatprep.subr.mxu0 0.0
  %991 = vmatpush1.msra.mxu0 0.0
  %992 = vmatprep.subr.mxu0 0.0
  %993 = vmatpush1.msra.mxu0 0.0
  %994 = vmatprep.subr.mxu0 0.0
  %995 = vmatpush1.msra.mxu0 0.0
  %996 = vmatprep.subr.mxu0 0.0
  %997 = vmatpush1.msra.mxu0 0.0
  %998 = vmatprep.mubr.f32.mxu0 0.0
  %999 = vmatmul.mubr.f32.gmra.mrb[0].mxu0 %v867
  %v1000 = vpop.f32.mrb[0].mxu0
  %v1001 = vadd.f32 0.0, %v1000
  %v1002 = vpop.f32.mrb[0].mxu0
  %v1003 = vadd.f32 0.0, %v1002
  %1004 = vdwg.mxu0
  %s1005 = scalar_lea.vmem [#allocation3], 48
  %v1006 = vld [vmem:[%s1005] sm:$0xff]
  %v1007 = vld [vmem:[%s1005 + $0x8] sm:$0xff]
  %v1008 = vld [vmem:[%s1005 + $0x10] sm:$0xff]
  %v1009 = vadd.f32 %v1006, %v1001
  %v1010 = vxor.u32 %v1009, 2147483648
  %v1011 = vmul.f32 %v1010, 1.442695
  %v1012 = vpow.pop %v1011
  %v1013 = vadd.f32 %v1012, 1.0
  %v1014 = vrcp.pop %v1013
  %v1015 = vmul.f32 1.0, %v1014
  %v1016 = vadd.f32 %v1007, %v1003
  %v1017 = vxor.u32 %v1016, 2147483648
  %v1018 = vmul.f32 %v1017, 1.442695
  %v1019 = vpow.pop %v1018
  %v1020 = vadd.f32 %v1019, 1.0
  %v1021 = vrcp.pop %v1020
  %v1022 = vmul.f32 1.0, %v1021
  %1023 = vmatprep.subr.mxu0 0.0
  %1024 = vmatpush1.msra.mxu0 %v420
  %1025 = vmatprep.subr.mxu0 0.0
  %1026 = vmatpush1.msra.mxu0 %v423
  %1027 = vmatprep.subr.mxu0 0.0
  %1028 = vmatpush1.msra.mxu0 %v426
  %1029 = vmatprep.subr.mxu0 0.0
  %1030 = vmatpush1.msra.mxu0 %v429
  %1031 = vmatprep.subr.mxu0 0.0
  %1032 = vmatpush1.msra.mxu0 %v432
  %1033 = vmatprep.subr.mxu0 0.0
  %1034 = vmatpush1.msra.mxu0 %v435
  %1035 = vmatprep.subr.mxu0 0.0
  %1036 = vmatpush1.msra.mxu0 %v438
  %1037 = vmatprep.subr.mxu0 0.0
  %1038 = vmatpush1.msra.mxu0 %v441
  %1039 = vmatprep.subr.mxu0 0.0
  %1040 = vmatpush1.msra.mxu0 %v444
  %1041 = vmatprep.subr.mxu0 0.0
  %1042 = vmatpush1.msra.mxu0 %v447
  %1043 = vmatprep.subr.mxu0 0.0
  %1044 = vmatpush1.msra.mxu0 %v450
  %1045 = vmatprep.subr.mxu0 0.0
  %1046 = vmatpush1.msra.mxu0 %v453
  %1047 = vmatprep.subr.mxu0 0.0
  %1048 = vmatpush1.msra.mxu0 %v456
  %1049 = vmatprep.subr.mxu0 0.0
  %1050 = vmatpush1.msra.mxu0 %v459
  %1051 = vmatprep.subr.mxu0 0.0
  %1052 = vmatpush1.msra.mxu0 %v462
  %1053 = vmatprep.subr.mxu0 0.0
  %1054 = vmatpush1.msra.mxu0 %v465
  %1055 = vmatprep.subr.mxu0 0.0
  %1056 = vmatpush1.msra.mxu0 0.0
  %1057 = vmatprep.subr.mxu0 0.0
  %1058 = vmatpush1.msra.mxu0 0.0
  %1059 = vmatprep.subr.mxu0 0.0
  %1060 = vmatpush1.msra.mxu0 0.0
  %1061 = vmatprep.subr.mxu0 0.0
  %1062 = vmatpush1.msra.mxu0 0.0
  %1063 = vmatprep.subr.mxu0 0.0
  %1064 = vmatpush1.msra.mxu0 0.0
  %1065 = vmatprep.subr.mxu0 0.0
  %1066 = vmatpush1.msra.mxu0 0.0
  %1067 = vmatprep.subr.mxu0 0.0
  %1068 = vmatpush1.msra.mxu0 0.0
  %1069 = vmatprep.subr.mxu0 0.0
  %1070 = vmatpush1.msra.mxu0 0.0
  %1071 = vmatprep.subr.mxu0 0.0
  %1072 = vmatpush1.msra.mxu0 0.0
  %1073 = vmatprep.subr.mxu0 0.0
  %1074 = vmatpush1.msra.mxu0 0.0
  %1075 = vmatprep.subr.mxu0 0.0
  %1076 = vmatpush1.msra.mxu0 0.0
  %1077 = vmatprep.subr.mxu0 0.0
  %1078 = vmatpush1.msra.mxu0 0.0
  %1079 = vmatprep.subr.mxu0 0.0
  %1080 = vmatpush1.msra.mxu0 0.0
  %1081 = vmatprep.subr.mxu0 0.0
  %1082 = vmatpush1.msra.mxu0 0.0
  %1083 = vmatprep.subr.mxu0 0.0
  %1084 = vmatpush1.msra.mxu0 0.0
  %1085 = vmatprep.subr.mxu0 0.0
  %1086 = vmatpush1.msra.mxu0 0.0
  %1087 = vmatprep.mubr.f32.mxu0 0.0
  %1088 = vmatmul.mubr.f32.gmra.mrb[0].mxu0 %v867
  %v1089 = vpop.f32.mrb[0].mxu0
  %v1090 = vadd.f32 %v470, %v1089
  %v1091 = vpop.f32.mrb[0].mxu0
  %1092 = vdwg.mxu0
  %v1093 = vmul.f32 %v1015, %v1090
  %v1094 = vadd.f32 %v1008, %v1093
  %v1095 = vtanh.pop %v1094
  %v1096 = vsub.f32 %v867, %v1095
  %v1097 = vmul.f32 %v1022, %v1096
  %v1098 = vadd.f32 %v1095, %v1097
  %v1100 = vcombine.high %v1098, %v1098
  %v1102 = vunpack.c.l.s4 1966171168
  %v1103 = vunpack.c.0.s8 %v1102
  %v1104 = vlaneseq
  %v1105 = vshrl.u32 %v1104, 7
  %v1106 = vsub.s32 %v1103, %v1105
  %v1107 = vrot.slane %v1098, %v1106
  %v1109 = vunpack.c.l.s4 1966171168
  %v1110 = vunpack.c.0.s8 %v1109
  %v1111 = vlaneseq
  %v1112 = vshrl.u32 %v1111, 7
  %v1113 = vsub.s32 %v1110, %v1112
  %v1114 = vrot.slane %v1100, %v1113
  %v1115 = vcombine.high %v1107, %v1107
  %v1116 = vcombine.high %v1114, %v1114
  %v1118 = vunpack.c.l.s4 1966171168
  %v1119 = vunpack.c.0.s8 %v1118
  %v1120 = vlaneseq
  %v1121 = vshrl.u32 %v1120, 7
  %v1122 = vsub.s32 %v1119, %v1121
  %v1123 = vrot.slane %v1107, %v1122
  %v1125 = vunpack.c.l.s4 1966171168
  %v1126 = vunpack.c.0.s8 %v1125
  %v1127 = vlaneseq
  %v1128 = vshrl.u32 %v1127, 7
  %v1129 = vsub.s32 %v1126, %v1128
  %v1130 = vrot.slane %v1114, %v1129
  %v1132 = vunpack.c.l.s4 1966171168
  %v1133 = vunpack.c.0.s8 %v1132
  %v1134 = vlaneseq
  %v1135 = vshrl.u32 %v1134, 7
  %v1136 = vsub.s32 %v1133, %v1135
  %v1137 = vrot.slane %v1115, %v1136
  %v1139 = vunpack.c.l.s4 1966171168
  %v1140 = vunpack.c.0.s8 %v1139
  %v1141 = vlaneseq
  %v1142 = vshrl.u32 %v1141, 7
  %v1143 = vsub.s32 %v1140, %v1142
  %v1144 = vrot.slane %v1116, %v1143
  %v1145 = vcombine.high %v1123, %v1123
  %v1146 = vcombine.high %v1130, %v1130
  %v1147 = vcombine.high %v1137, %v1137
  %v1148 = vcombine.high %v1144, %v1144
  %1157 = vst.msk [vmem:[%s5 + $0x2] sm:$0x1] %vm694, %v1123
  %1158 = vst.msk [vmem:[%s5 + $0xa] sm:$0x1] %vm694, %v1137
  %1159 = vst.msk [vmem:[%s5 + $0x12] sm:$0x1] %vm694, %v1145
  %1160 = vst.msk [vmem:[%s5 + $0x1a] sm:$0x1] %vm694, %v1147
  %1161 = vst.msk [vmem:[%s5 + $0x22] sm:$0x1] %vm694, %v1130
  %1162 = vst.msk [vmem:[%s5 + $0x2a] sm:$0x1] %vm694, %v1144
  %1163 = vst.msk [vmem:[%s5 + $0x32] sm:$0x1] %vm694, %v1146
  %1164 = vst.msk [vmem:[%s5 + $0x3a] sm:$0x1] %vm694, %v1148
  %1165 = vmatprep.subr.mxu0 %v419
  %1166 = vmatpush1.msra.mxu0 %v418
  %1167 = vmatprep.subr.mxu0 %v422
  %1168 = vmatpush1.msra.mxu0 %v421
  %1169 = vmatprep.subr.mxu0 %v425
  %1170 = vmatpush1.msra.mxu0 %v424
  %1171 = vmatprep.subr.mxu0 %v428
  %1172 = vmatpush1.msra.mxu0 %v427
  %1173 = vmatprep.subr.mxu0 %v431
  %1174 = vmatpush1.msra.mxu0 %v430
  %1175 = vmatprep.subr.mxu0 %v434
  %1176 = vmatpush1.msra.mxu0 %v433
  %1177 = vmatprep.subr.mxu0 %v437
  %1178 = vmatpush1.msra.mxu0 %v436
  %1179 = vmatprep.subr.mxu0 %v440
  %1180 = vmatpush1.msra.mxu0 %v439
  %1181 = vmatprep.subr.mxu0 %v443
  %1182 = vmatpush1.msra.mxu0 %v442
  %1183 = vmatprep.subr.mxu0 %v446
  %1184 = vmatpush1.msra.mxu0 %v445
  %1185 = vmatprep.subr.mxu0 %v449
  %1186 = vmatpush1.msra.mxu0 %v448
  %1187 = vmatprep.subr.mxu0 %v452
  %1188 = vmatpush1.msra.mxu0 %v451
  %1189 = vmatprep.subr.mxu0 %v455
  %1190 = vmatpush1.msra.mxu0 %v454
  %1191 = vmatprep.subr.mxu0 %v458
  %1192 = vmatpush1.msra.mxu0 %v457
  %1193 = vmatprep.subr.mxu0 %v461
  %1194 = vmatpush1.msra.mxu0 %v460
  %1195 = vmatprep.subr.mxu0 %v464
  %1196 = vmatpush1.msra.mxu0 %v463
  %1197 = vmatprep.subr.mxu0 0.0
  %1198 = vmatpush1.msra.mxu0 0.0
  %1199 = vmatprep.subr.mxu0 0.0
  %1200 = vmatpush1.msra.mxu0 0.0
  %1201 = vmatprep.subr.mxu0 0.0
  %1202 = vmatpush1.msra.mxu0 0.0
  %1203 = vmatprep.subr.mxu0 0.0
  %1204 = vmatpush1.msra.mxu0 0.0
  %1205 = vmatprep.subr.mxu0 0.0
  %1206 = vmatpush1.msra.mxu0 0.0
  %1207 = vmatprep.subr.mxu0 0.0
  %1208 = vmatpush1.msra.mxu0 0.0
  %1209 = vmatprep.subr.mxu0 0.0
  %1210 = vmatpush1.msra.mxu0 0.0
  %1211 = vmatprep.subr.mxu0 0.0
  %1212 = vmatpush1.msra.mxu0 0.0
  %1213 = vmatprep.subr.mxu0 0.0
  %1214 = vmatpush1.msra.mxu0 0.0
  %1215 = vmatprep.subr.mxu0 0.0
  %1216 = vmatpush1.msra.mxu0 0.0
  %1217 = vmatprep.subr.mxu0 0.0
  %1218 = vmatpush1.msra.mxu0 0.0
  %1219 = vmatprep.subr.mxu0 0.0
  %1220 = vmatpush1.msra.mxu0 0.0
  %1221 = vmatprep.subr.mxu0 0.0
  %1222 = vmatpush1.msra.mxu0 0.0
  %1223 = vmatprep.subr.mxu0 0.0
  %1224 = vmatpush1.msra.mxu0 0.0
  %1225 = vmatprep.subr.mxu0 0.0
  %1226 = vmatpush1.msra.mxu0 0.0
  %1227 = vmatprep.subr.mxu0 0.0
  %1228 = vmatpush1.msra.mxu0 0.0
  %1229 = vmatprep.mubr.f32.mxu0 0.0
  %1230 = vmatmul.mubr.f32.gmra.mrb[0].mxu0 %v1098
  %v1231 = vpop.f32.mrb[0].mxu0
  %v1232 = vadd.f32 0.0, %v1231
  %v1233 = vpop.f32.mrb[0].mxu0
  %v1234 = vadd.f32 0.0, %v1233
  %1235 = vdwg.mxu0
  %s1236 = scalar_lea.vmem [#allocation3], 72
  %v1237 = vld [vmem:[%s1236] sm:$0xff]
  %v1238 = vld [vmem:[%s1236 + $0x8] sm:$0xff]
  %v1239 = vld [vmem:[%s1236 + $0x10] sm:$0xff]
  %v1240 = vadd.f32 %v1237, %v1232
  %v1241 = vxor.u32 %v1240, 2147483648
  %v1242 = vmul.f32 %v1241, 1.442695
  %v1243 = vpow.pop %v1242
  %v1244 = vadd.f32 %v1243, 1.0
  %v1245 = vrcp.pop %v1244
  %v1246 = vmul.f32 1.0, %v1245
  %v1247 = vadd.f32 %v1238, %v1234
  %v1248 = vxor.u32 %v1247, 2147483648
  %v1249 = vmul.f32 %v1248, 1.442695
  %v1250 = vpow.pop %v1249
  %v1251 = vadd.f32 %v1250, 1.0
  %v1252 = vrcp.pop %v1251
  %v1253 = vmul.f32 1.0, %v1252
  %1254 = vmatprep.subr.mxu0 0.0
  %1255 = vmatpush1.msra.mxu0 %v420
  %1256 = vmatprep.subr.mxu0 0.0
  %1257 = vmatpush1.msra.mxu0 %v423
  %1258 = vmatprep.subr.mxu0 0.0
  %1259 = vmatpush1.msra.mxu0 %v426
  %1260 = vmatprep.subr.mxu0 0.0
  %1261 = vmatpush1.msra.mxu0 %v429
  %1262 = vmatprep.subr.mxu0 0.0
  %1263 = vmatpush1.msra.mxu0 %v432
  %1264 = vmatprep.subr.mxu0 0.0
  %1265 = vmatpush1.msra.mxu0 %v435
  %1266 = vmatprep.subr.mxu0 0.0
  %1267 = vmatpush1.msra.mxu0 %v438
  %1268 = vmatprep.subr.mxu0 0.0
  %1269 = vmatpush1.msra.mxu0 %v441
  %1270 = vmatprep.subr.mxu0 0.0
  %1271 = vmatpush1.msra.mxu0 %v444
  %1272 = vmatprep.subr.mxu0 0.0
  %1273 = vmatpush1.msra.mxu0 %v447
  %1274 = vmatprep.subr.mxu0 0.0
  %1275 = vmatpush1.msra.mxu0 %v450
  %1276 = vmatprep.subr.mxu0 0.0
  %1277 = vmatpush1.msra.mxu0 %v453
  %1278 = vmatprep.subr.mxu0 0.0
  %1279 = vmatpush1.msra.mxu0 %v456
  %1280 = vmatprep.subr.mxu0 0.0
  %1281 = vmatpush1.msra.mxu0 %v459
  %1282 = vmatprep.subr.mxu0 0.0
  %1283 = vmatpush1.msra.mxu0 %v462
  %1284 = vmatprep.subr.mxu0 0.0
  %1285 = vmatpush1.msra.mxu0 %v465
  %1286 = vmatprep.subr.mxu0 0.0
  %1287 = vmatpush1.msra.mxu0 0.0
  %1288 = vmatprep.subr.mxu0 0.0
  %1289 = vmatpush1.msra.mxu0 0.0
  %1290 = vmatprep.subr.mxu0 0.0
  %1291 = vmatpush1.msra.mxu0 0.0
  %1292 = vmatprep.subr.mxu0 0.0
  %1293 = vmatpush1.msra.mxu0 0.0
  %1294 = vmatprep.subr.mxu0 0.0
  %1295 = vmatpush1.msra.mxu0 0.0
  %1296 = vmatprep.subr.mxu0 0.0
  %1297 = vmatpush1.msra.mxu0 0.0
  %1298 = vmatprep.subr.mxu0 0.0
  %1299 = vmatpush1.msra.mxu0 0.0
  %1300 = vmatprep.subr.mxu0 0.0
  %1301 = vmatpush1.msra.mxu0 0.0
  %1302 = vmatprep.subr.mxu0 0.0
  %1303 = vmatpush1.msra.mxu0 0.0
  %1304 = vmatprep.subr.mxu0 0.0
  %1305 = vmatpush1.msra.mxu0 0.0
  %1306 = vmatprep.subr.mxu0 0.0
  %1307 = vmatpush1.msra.mxu0 0.0
  %1308 = vmatprep.subr.mxu0 0.0
  %1309 = vmatpush1.msra.mxu0 0.0
  %1310 = vmatprep.subr.mxu0 0.0
  %1311 = vmatpush1.msra.mxu0 0.0
  %1312 = vmatprep.subr.mxu0 0.0
  %1313 = vmatpush1.msra.mxu0 0.0
  %1314 = vmatprep.subr.mxu0 0.0
  %1315 = vmatpush1.msra.mxu0 0.0
  %1316 = vmatprep.subr.mxu0 0.0
  %1317 = vmatpush1.msra.mxu0 0.0
  %1318 = vmatprep.mubr.f32.mxu0 0.0
  %1319 = vmatmul.mubr.f32.gmra.mrb[0].mxu0 %v1098
  %v1320 = vpop.f32.mrb[0].mxu0
  %v1321 = vadd.f32 %v470, %v1320
  %v1322 = vpop.f32.mrb[0].mxu0
  %1323 = vdwg.mxu0
  %v1324 = vmul.f32 %v1246, %v1321
  %v1325 = vadd.f32 %v1239, %v1324
  %v1326 = vtanh.pop %v1325
  %v1327 = vsub.f32 %v1098, %v1326
  %v1328 = vmul.f32 %v1253, %v1327
  %v1329 = vadd.f32 %v1326, %v1328
  %v1331 = vcombine.high %v1329, %v1329
  %v1333 = vunpack.c.l.s4 1966171168
  %v1334 = vunpack.c.0.s8 %v1333
  %v1335 = vlaneseq
  %v1336 = vshrl.u32 %v1335, 7
  %v1337 = vsub.s32 %v1334, %v1336
  %v1338 = vrot.slane %v1329, %v1337
  %v1340 = vunpack.c.l.s4 1966171168
  %v1341 = vunpack.c.0.s8 %v1340
  %v1342 = vlaneseq
  %v1343 = vshrl.u32 %v1342, 7
  %v1344 = vsub.s32 %v1341, %v1343
  %v1345 = vrot.slane %v1331, %v1344
  %v1346 = vcombine.high %v1338, %v1338
  %v1347 = vcombine.high %v1345, %v1345
  %v1349 = vunpack.c.l.s4 1966171168
  %v1350 = vunpack.c.0.s8 %v1349
  %v1351 = vlaneseq
  %v1352 = vshrl.u32 %v1351, 7
  %v1353 = vsub.s32 %v1350, %v1352
  %v1354 = vrot.slane %v1338, %v1353
  %v1356 = vunpack.c.l.s4 1966171168
  %v1357 = vunpack.c.0.s8 %v1356
  %v1358 = vlaneseq
  %v1359 = vshrl.u32 %v1358, 7
  %v1360 = vsub.s32 %v1357, %v1359
  %v1361 = vrot.slane %v1345, %v1360
  %v1363 = vunpack.c.l.s4 1966171168
  %v1364 = vunpack.c.0.s8 %v1363
  %v1365 = vlaneseq
  %v1366 = vshrl.u32 %v1365, 7
  %v1367 = vsub.s32 %v1364, %v1366
  %v1368 = vrot.slane %v1346, %v1367
  %v1370 = vunpack.c.l.s4 1966171168
  %v1371 = vunpack.c.0.s8 %v1370
  %v1372 = vlaneseq
  %v1373 = vshrl.u32 %v1372, 7
  %v1374 = vsub.s32 %v1371, %v1373
  %v1375 = vrot.slane %v1347, %v1374
  %v1376 = vcombine.high %v1354, %v1354
  %v1377 = vcombine.high %v1361, %v1361
  %v1378 = vcombine.high %v1368, %v1368
  %v1379 = vcombine.high %v1375, %v1375
  %1388 = vst.msk [vmem:[%s5 + $0x3] sm:$0x1] %vm694, %v1354
  %1389 = vst.msk [vmem:[%s5 + $0xb] sm:$0x1] %vm694, %v1368
  %1390 = vst.msk [vmem:[%s5 + $0x13] sm:$0x1] %vm694, %v1376
  %1391 = vst.msk [vmem:[%s5 + $0x1b] sm:$0x1] %vm694, %v1378
  %1392 = vst.msk [vmem:[%s5 + $0x23] sm:$0x1] %vm694, %v1361
  %1393 = vst.msk [vmem:[%s5 + $0x2b] sm:$0x1] %vm694, %v1375
  %1394 = vst.msk [vmem:[%s5 + $0x33] sm:$0x1] %vm694, %v1377
  %1395 = vst.msk [vmem:[%s5 + $0x3b] sm:$0x1] %vm694, %v1379
  %1396 = vmatprep.subr.mxu0 %v419
  %1397 = vmatpush1.msra.mxu0 %v418
  %1398 = vmatprep.subr.mxu0 %v422
  %1399 = vmatpush1.msra.mxu0 %v421
  %1400 = vmatprep.subr.mxu0 %v425
  %1401 = vmatpush1.msra.mxu0 %v424
  %1402 = vmatprep.subr.mxu0 %v428
  %1403 = vmatpush1.msra.mxu0 %v427
  %1404 = vmatprep.subr.mxu0 %v431
  %1405 = vmatpush1.msra.mxu0 %v430
  %1406 = vmatprep.subr.mxu0 %v434
  %1407 = vmatpush1.msra.mxu0 %v433
  %1408 = vmatprep.subr.mxu0 %v437
  %1409 = vmatpush1.msra.mxu0 %v436
  %1410 = vmatprep.subr.mxu0 %v440
  %1411 = vmatpush1.msra.mxu0 %v439
  %1412 = vmatprep.subr.mxu0 %v443
  %1413 = vmatpush1.msra.mxu0 %v442
  %1414 = vmatprep.subr.mxu0 %v446
  %1415 = vmatpush1.msra.mxu0 %v445
  %1416 = vmatprep.subr.mxu0 %v449
  %1417 = vmatpush1.msra.mxu0 %v448
  %1418 = vmatprep.subr.mxu0 %v452
  %1419 = vmatpush1.msra.mxu0 %v451
  %1420 = vmatprep.subr.mxu0 %v455
  %1421 = vmatpush1.msra.mxu0 %v454
  %1422 = vmatprep.subr.mxu0 %v458
  %1423 = vmatpush1.msra.mxu0 %v457
  %1424 = vmatprep.subr.mxu0 %v461
  %1425 = vmatpush1.msra.mxu0 %v460
  %1426 = vmatprep.subr.mxu0 %v464
  %1427 = vmatpush1.msra.mxu0 %v463
  %1428 = vmatprep.subr.mxu0 0.0
  %1429 = vmatpush1.msra.mxu0 0.0
  %1430 = vmatprep.subr.mxu0 0.0
  %1431 = vmatpush1.msra.mxu0 0.0
  %1432 = vmatprep.subr.mxu0 0.0
  %1433 = vmatpush1.msra.mxu0 0.0
  %1434 = vmatprep.subr.mxu0 0.0
  %1435 = vmatpush1.msra.mxu0 0.0
  %1436 = vmatprep.subr.mxu0 0.0
  %1437 = vmatpush1.msra.mxu0 0.0
  %1438 = vmatprep.subr.mxu0 0.0
  %1439 = vmatpush1.msra.mxu0 0.0
  %1440 = vmatprep.subr.mxu0 0.0
  %1441 = vmatpush1.msra.mxu0 0.0
  %1442 = vmatprep.subr.mxu0 0.0
  %1443 = vmatpush1.msra.mxu0 0.0
  %1444 = vmatprep.subr.mxu0 0.0
  %1445 = vmatpush1.msra.mxu0 0.0
  %1446 = vmatprep.subr.mxu0 0.0
  %1447 = vmatpush1.msra.mxu0 0.0
  %1448 = vmatprep.subr.mxu0 0.0
  %1449 = vmatpush1.msra.mxu0 0.0
  %1450 = vmatprep.subr.mxu0 0.0
  %1451 = vmatpush1.msra.mxu0 0.0
  %1452 = vmatprep.subr.mxu0 0.0
  %1453 = vmatpush1.msra.mxu0 0.0
  %1454 = vmatprep.subr.mxu0 0.0
  %1455 = vmatpush1.msra.mxu0 0.0
  %1456 = vmatprep.subr.mxu0 0.0
  %1457 = vmatpush1.msra.mxu0 0.0
  %1458 = vmatprep.subr.mxu0 0.0
  %1459 = vmatpush1.msra.mxu0 0.0
  %1460 = vmatprep.mubr.f32.mxu0 0.0
  %1461 = vmatmul.mubr.f32.gmra.mrb[0].mxu0 %v1329
  %v1462 = vpop.f32.mrb[0].mxu0
  %v1463 = vadd.f32 0.0, %v1462
  %v1464 = vpop.f32.mrb[0].mxu0
  %v1465 = vadd.f32 0.0, %v1464
  %1466 = vdwg.mxu0
  %s1467 = scalar_lea.vmem [#allocation3], 96
  %v1468 = vld [vmem:[%s1467] sm:$0xff]
  %v1469 = vld [vmem:[%s1467 + $0x8] sm:$0xff]
  %v1470 = vld [vmem:[%s1467 + $0x10] sm:$0xff]
  %v1471 = vadd.f32 %v1468, %v1463
  %v1472 = vxor.u32 %v1471, 2147483648
  %v1473 = vmul.f32 %v1472, 1.442695
  %v1474 = vpow.pop %v1473
  %v1475 = vadd.f32 %v1474, 1.0
  %v1476 = vrcp.pop %v1475
  %v1477 = vmul.f32 1.0, %v1476
  %v1478 = vadd.f32 %v1469, %v1465
  %v1479 = vxor.u32 %v1478, 2147483648
  %v1480 = vmul.f32 %v1479, 1.442695
  %v1481 = vpow.pop %v1480
  %v1482 = vadd.f32 %v1481, 1.0
  %v1483 = vrcp.pop %v1482
  %v1484 = vmul.f32 1.0, %v1483
  %1485 = vmatprep.subr.mxu0 0.0
  %1486 = vmatpush1.msra.mxu0 %v420
  %1487 = vmatprep.subr.mxu0 0.0
  %1488 = vmatpush1.msra.mxu0 %v423
  %1489 = vmatprep.subr.mxu0 0.0
  %1490 = vmatpush1.msra.mxu0 %v426
  %1491 = vmatprep.subr.mxu0 0.0
  %1492 = vmatpush1.msra.mxu0 %v429
  %1493 = vmatprep.subr.mxu0 0.0
  %1494 = vmatpush1.msra.mxu0 %v432
  %1495 = vmatprep.subr.mxu0 0.0
  %1496 = vmatpush1.msra.mxu0 %v435
  %1497 = vmatprep.subr.mxu0 0.0
  %1498 = vmatpush1.msra.mxu0 %v438
  %1499 = vmatprep.subr.mxu0 0.0
  %1500 = vmatpush1.msra.mxu0 %v441
  %1501 = vmatprep.subr.mxu0 0.0
  %1502 = vmatpush1.msra.mxu0 %v444
  %1503 = vmatprep.subr.mxu0 0.0
  %1504 = vmatpush1.msra.mxu0 %v447
  %1505 = vmatprep.subr.mxu0 0.0
  %1506 = vmatpush1.msra.mxu0 %v450
  %1507 = vmatprep.subr.mxu0 0.0
  %1508 = vmatpush1.msra.mxu0 %v453
  %1509 = vmatprep.subr.mxu0 0.0
  %1510 = vmatpush1.msra.mxu0 %v456
  %1511 = vmatprep.subr.mxu0 0.0
  %1512 = vmatpush1.msra.mxu0 %v459
  %1513 = vmatprep.subr.mxu0 0.0
  %1514 = vmatpush1.msra.mxu0 %v462
  %1515 = vmatprep.subr.mxu0 0.0
  %1516 = vmatpush1.msra.mxu0 %v465
  %1517 = vmatprep.subr.mxu0 0.0
  %1518 = vmatpush1.msra.mxu0 0.0
  %1519 = vmatprep.subr.mxu0 0.0
  %1520 = vmatpush1.msra.mxu0 0.0
  %1521 = vmatprep.subr.mxu0 0.0
  %1522 = vmatpush1.msra.mxu0 0.0
  %1523 = vmatprep.subr.mxu0 0.0
  %1524 = vmatpush1.msra.mxu0 0.0
  %1525 = vmatprep.subr.mxu0 0.0
  %1526 = vmatpush1.msra.mxu0 0.0
  %1527 = vmatprep.subr.mxu0 0.0
  %1528 = vmatpush1.msra.mxu0 0.0
  %1529 = vmatprep.subr.mxu0 0.0
  %1530 = vmatpush1.msra.mxu0 0.0
  %1531 = vmatprep.subr.mxu0 0.0
  %1532 = vmatpush1.msra.mxu0 0.0
  %1533 = vmatprep.subr.mxu0 0.0
  %1534 = vmatpush1.msra.mxu0 0.0
  %1535 = vmatprep.subr.mxu0 0.0
  %1536 = vmatpush1.msra.mxu0 0.0
  %1537 = vmatprep.subr.mxu0 0.0
  %1538 = vmatpush1.msra.mxu0 0.0
  %1539 = vmatprep.subr.mxu0 0.0
  %1540 = vmatpush1.msra.mxu0 0.0
  %1541 = vmatprep.subr.mxu0 0.0
  %1542 = vmatpush1.msra.mxu0 0.0
  %1543 = vmatprep.subr.mxu0 0.0
  %1544 = vmatpush1.msra.mxu0 0.0
  %1545 = vmatprep.subr.mxu0 0.0
  %1546 = vmatpush1.msra.mxu0 0.0
  %1547 = vmatprep.subr.mxu0 0.0
  %1548 = vmatpush1.msra.mxu0 0.0
  %1549 = vmatprep.mubr.f32.mxu0 0.0
  %1550 = vmatmul.mubr.f32.gmra.mrb[0].mxu0 %v1329
  %v1551 = vpop.f32.mrb[0].mxu0
  %v1552 = vadd.f32 %v470, %v1551
  %v1553 = vpop.f32.mrb[0].mxu0
  %1554 = vdwg.mxu0
  %v1555 = vmul.f32 %v1477, %v1552
  %v1556 = vadd.f32 %v1470, %v1555
  %v1557 = vtanh.pop %v1556
  %v1558 = vsub.f32 %v1329, %v1557
  %v1559 = vmul.f32 %v1484, %v1558
  %v1560 = vadd.f32 %v1557, %v1559
  %v1562 = vcombine.high %v1560, %v1560
  %v1564 = vunpack.c.l.s4 1966171168
  %v1565 = vunpack.c.0.s8 %v1564
  %v1566 = vlaneseq
  %v1567 = vshrl.u32 %v1566, 7
  %v1568 = vsub.s32 %v1565, %v1567
  %v1569 = vrot.slane %v1560, %v1568
  %v1571 = vunpack.c.l.s4 1966171168
  %v1572 = vunpack.c.0.s8 %v1571
  %v1573 = vlaneseq
  %v1574 = vshrl.u32 %v1573, 7
  %v1575 = vsub.s32 %v1572, %v1574
  %v1576 = vrot.slane %v1562, %v1575
  %v1577 = vcombine.high %v1569, %v1569
  %v1578 = vcombine.high %v1576, %v1576
  %v1580 = vunpack.c.l.s4 1966171168
  %v1581 = vunpack.c.0.s8 %v1580
  %v1582 = vlaneseq
  %v1583 = vshrl.u32 %v1582, 7
  %v1584 = vsub.s32 %v1581, %v1583
  %v1585 = vrot.slane %v1569, %v1584
  %v1587 = vunpack.c.l.s4 1966171168
  %v1588 = vunpack.c.0.s8 %v1587
  %v1589 = vlaneseq
  %v1590 = vshrl.u32 %v1589, 7
  %v1591 = vsub.s32 %v1588, %v1590
  %v1592 = vrot.slane %v1576, %v1591
  %v1594 = vunpack.c.l.s4 1966171168
  %v1595 = vunpack.c.0.s8 %v1594
  %v1596 = vlaneseq
  %v1597 = vshrl.u32 %v1596, 7
  %v1598 = vsub.s32 %v1595, %v1597
  %v1599 = vrot.slane %v1577, %v1598
  %v1601 = vunpack.c.l.s4 1966171168
  %v1602 = vunpack.c.0.s8 %v1601
  %v1603 = vlaneseq
  %v1604 = vshrl.u32 %v1603, 7
  %v1605 = vsub.s32 %v1602, %v1604
  %v1606 = vrot.slane %v1578, %v1605
  %v1607 = vcombine.high %v1585, %v1585
  %v1608 = vcombine.high %v1592, %v1592
  %v1609 = vcombine.high %v1599, %v1599
  %v1610 = vcombine.high %v1606, %v1606
  %1619 = vst.msk [vmem:[%s5 + $0x4] sm:$0x1] %vm694, %v1585
  %1620 = vst.msk [vmem:[%s5 + $0xc] sm:$0x1] %vm694, %v1599
  %1621 = vst.msk [vmem:[%s5 + $0x14] sm:$0x1] %vm694, %v1607
  %1622 = vst.msk [vmem:[%s5 + $0x1c] sm:$0x1] %vm694, %v1609
  %1623 = vst.msk [vmem:[%s5 + $0x24] sm:$0x1] %vm694, %v1592
  %1624 = vst.msk [vmem:[%s5 + $0x2c] sm:$0x1] %vm694, %v1606
  %1625 = vst.msk [vmem:[%s5 + $0x34] sm:$0x1] %vm694, %v1608
  %1626 = vst.msk [vmem:[%s5 + $0x3c] sm:$0x1] %vm694, %v1610
  %1627 = vmatprep.subr.mxu0 %v419
  %1628 = vmatpush1.msra.mxu0 %v418
  %1629 = vmatprep.subr.mxu0 %v422
  %1630 = vmatpush1.msra.mxu0 %v421
  %1631 = vmatprep.subr.mxu0 %v425
  %1632 = vmatpush1.msra.mxu0 %v424
  %1633 = vmatprep.subr.mxu0 %v428
  %1634 = vmatpush1.msra.mxu0 %v427
  %1635 = vmatprep.subr.mxu0 %v431
  %1636 = vmatpush1.msra.mxu0 %v430
  %1637 = vmatprep.subr.mxu0 %v434
  %1638 = vmatpush1.msra.mxu0 %v433
  %1639 = vmatprep.subr.mxu0 %v437
  %1640 = vmatpush1.msra.mxu0 %v436
  %1641 = vmatprep.subr.mxu0 %v440
  %1642 = vmatpush1.msra.mxu0 %v439
  %1643 = vmatprep.subr.mxu0 %v443
  %1644 = vmatpush1.msra.mxu0 %v442
  %1645 = vmatprep.subr.mxu0 %v446
  %1646 = vmatpush1.msra.mxu0 %v445
  %1647 = vmatprep.subr.mxu0 %v449
  %1648 = vmatpush1.msra.mxu0 %v448
  %1649 = vmatprep.subr.mxu0 %v452
  %1650 = vmatpush1.msra.mxu0 %v451
  %1651 = vmatprep.subr.mxu0 %v455
  %1652 = vmatpush1.msra.mxu0 %v454
  %1653 = vmatprep.subr.mxu0 %v458
  %1654 = vmatpush1.msra.mxu0 %v457
  %1655 = vmatprep.subr.mxu0 %v461
  %1656 = vmatpush1.msra.mxu0 %v460
  %1657 = vmatprep.subr.mxu0 %v464
  %1658 = vmatpush1.msra.mxu0 %v463
  %1659 = vmatprep.subr.mxu0 0.0
  %1660 = vmatpush1.msra.mxu0 0.0
  %1661 = vmatprep.subr.mxu0 0.0
  %1662 = vmatpush1.msra.mxu0 0.0
  %1663 = vmatprep.subr.mxu0 0.0
  %1664 = vmatpush1.msra.mxu0 0.0
  %1665 = vmatprep.subr.mxu0 0.0
  %1666 = vmatpush1.msra.mxu0 0.0
  %1667 = vmatprep.subr.mxu0 0.0
  %1668 = vmatpush1.msra.mxu0 0.0
  %1669 = vmatprep.subr.mxu0 0.0
  %1670 = vmatpush1.msra.mxu0 0.0
  %1671 = vmatprep.subr.mxu0 0.0
  %1672 = vmatpush1.msra.mxu0 0.0
  %1673 = vmatprep.subr.mxu0 0.0
  %1674 = vmatpush1.msra.mxu0 0.0
  %1675 = vmatprep.subr.mxu0 0.0
  %1676 = vmatpush1.msra.mxu0 0.0
  %1677 = vmatprep.subr.mxu0 0.0
  %1678 = vmatpush1.msra.mxu0 0.0
  %1679 = vmatprep.subr.mxu0 0.0
  %1680 = vmatpush1.msra.mxu0 0.0
  %1681 = vmatprep.subr.mxu0 0.0
  %1682 = vmatpush1.msra.mxu0 0.0
  %1683 = vmatprep.subr.mxu0 0.0
  %1684 = vmatpush1.msra.mxu0 0.0
  %1685 = vmatprep.subr.mxu0 0.0
  %1686 = vmatpush1.msra.mxu0 0.0
  %1687 = vmatprep.subr.mxu0 0.0
  %1688 = vmatpush1.msra.mxu0 0.0
  %1689 = vmatprep.subr.mxu0 0.0
  %1690 = vmatpush1.msra.mxu0 0.0
  %1691 = vmatprep.mubr.f32.mxu0 0.0
  %1692 = vmatmul.mubr.f32.gmra.mrb[0].mxu0 %v1560
  %v1693 = vpop.f32.mrb[0].mxu0
  %v1694 = vadd.f32 0.0, %v1693
  %v1695 = vpop.f32.mrb[0].mxu0
  %v1696 = vadd.f32 0.0, %v1695
  %1697 = vdwg.mxu0
  %s1698 = scalar_lea.vmem [#allocation3], 120
  %v1699 = vld [vmem:[%s1698] sm:$0xff]
  %v1700 = vld [vmem:[%s1698 + $0x8] sm:$0xff]
  %v1701 = vld [vmem:[%s1698 + $0x10] sm:$0xff]
  %v1702 = vadd.f32 %v1699, %v1694
  %v1703 = vxor.u32 %v1702, 2147483648
  %v1704 = vmul.f32 %v1703, 1.442695
  %v1705 = vpow.pop %v1704
  %v1706 = vadd.f32 %v1705, 1.0
  %v1707 = vrcp.pop %v1706
  %v1708 = vmul.f32 1.0, %v1707
  %v1709 = vadd.f32 %v1700, %v1696
  %v1710 = vxor.u32 %v1709, 2147483648
  %v1711 = vmul.f32 %v1710, 1.442695
  %v1712 = vpow.pop %v1711
  %v1713 = vadd.f32 %v1712, 1.0
  %v1714 = vrcp.pop %v1713
  %v1715 = vmul.f32 1.0, %v1714
  %1716 = vmatprep.subr.mxu0 0.0
  %1717 = vmatpush1.msra.mxu0 %v420
  %1718 = vmatprep.subr.mxu0 0.0
  %1719 = vmatpush1.msra.mxu0 %v423
  %1720 = vmatprep.subr.mxu0 0.0
  %1721 = vmatpush1.msra.mxu0 %v426
  %1722 = vmatprep.subr.mxu0 0.0
  %1723 = vmatpush1.msra.mxu0 %v429
  %1724 = vmatprep.subr.mxu0 0.0
  %1725 = vmatpush1.msra.mxu0 %v432
  %1726 = vmatprep.subr.mxu0 0.0
  %1727 = vmatpush1.msra.mxu0 %v435
  %1728 = vmatprep.subr.mxu0 0.0
  %1729 = vmatpush1.msra.mxu0 %v438
  %1730 = vmatprep.subr.mxu0 0.0
  %1731 = vmatpush1.msra.mxu0 %v441
  %1732 = vmatprep.subr.mxu0 0.0
  %1733 = vmatpush1.msra.mxu0 %v444
  %1734 = vmatprep.subr.mxu0 0.0
  %1735 = vmatpush1.msra.mxu0 %v447
  %1736 = vmatprep.subr.mxu0 0.0
  %1737 = vmatpush1.msra.mxu0 %v450
  %1738 = vmatprep.subr.mxu0 0.0
  %1739 = vmatpush1.msra.mxu0 %v453
  %1740 = vmatprep.subr.mxu0 0.0
  %1741 = vmatpush1.msra.mxu0 %v456
  %1742 = vmatprep.subr.mxu0 0.0
  %1743 = vmatpush1.msra.mxu0 %v459
  %1744 = vmatprep.subr.mxu0 0.0
  %1745 = vmatpush1.msra.mxu0 %v462
  %1746 = vmatprep.subr.mxu0 0.0
  %1747 = vmatpush1.msra.mxu0 %v465
  %1748 = vmatprep.subr.mxu0 0.0
  %1749 = vmatpush1.msra.mxu0 0.0
  %1750 = vmatprep.subr.mxu0 0.0
  %1751 = vmatpush1.msra.mxu0 0.0
  %1752 = vmatprep.subr.mxu0 0.0
  %1753 = vmatpush1.msra.mxu0 0.0
  %1754 = vmatprep.subr.mxu0 0.0
  %1755 = vmatpush1.msra.mxu0 0.0
  %1756 = vmatprep.subr.mxu0 0.0
  %1757 = vmatpush1.msra.mxu0 0.0
  %1758 = vmatprep.subr.mxu0 0.0
  %1759 = vmatpush1.msra.mxu0 0.0
  %1760 = vmatprep.subr.mxu0 0.0
  %1761 = vmatpush1.msra.mxu0 0.0
  %1762 = vmatprep.subr.mxu0 0.0
  %1763 = vmatpush1.msra.mxu0 0.0
  %1764 = vmatprep.subr.mxu0 0.0
  %1765 = vmatpush1.msra.mxu0 0.0
  %1766 = vmatprep.subr.mxu0 0.0
  %1767 = vmatpush1.msra.mxu0 0.0
  %1768 = vmatprep.subr.mxu0 0.0
  %1769 = vmatpush1.msra.mxu0 0.0
  %1770 = vmatprep.subr.mxu0 0.0
  %1771 = vmatpush1.msra.mxu0 0.0
  %1772 = vmatprep.subr.mxu0 0.0
  %1773 = vmatpush1.msra.mxu0 0.0
  %1774 = vmatprep.subr.mxu0 0.0
  %1775 = vmatpush1.msra.mxu0 0.0
  %1776 = vmatprep.subr.mxu0 0.0
  %1777 = vmatpush1.msra.mxu0 0.0
  %1778 = vmatprep.subr.mxu0 0.0
  %1779 = vmatpush1.msra.mxu0 0.0
  %1780 = vmatprep.mubr.f32.mxu0 0.0
  %1781 = vmatmul.mubr.f32.gmra.mrb[0].mxu0 %v1560
  %v1782 = vpop.f32.mrb[0].mxu0
  %v1783 = vadd.f32 %v470, %v1782
  %v1784 = vpop.f32.mrb[0].mxu0
  %1785 = vdwg.mxu0
  %v1786 = vmul.f32 %v1708, %v1783
  %v1787 = vadd.f32 %v1701, %v1786
  %v1788 = vtanh.pop %v1787
  %v1789 = vsub.f32 %v1560, %v1788
  %v1790 = vmul.f32 %v1715, %v1789
  %v1791 = vadd.f32 %v1788, %v1790
  %v1793 = vcombine.high %v1791, %v1791
  %v1795 = vunpack.c.l.s4 1966171168
  %v1796 = vunpack.c.0.s8 %v1795
  %v1797 = vlaneseq
  %v1798 = vshrl.u32 %v1797, 7
  %v1799 = vsub.s32 %v1796, %v1798
  %v1800 = vrot.slane %v1791, %v1799
  %v1802 = vunpack.c.l.s4 1966171168
  %v1803 = vunpack.c.0.s8 %v1802
  %v1804 = vlaneseq
  %v1805 = vshrl.u32 %v1804, 7
  %v1806 = vsub.s32 %v1803, %v1805
  %v1807 = vrot.slane %v1793, %v1806
  %v1808 = vcombine.high %v1800, %v1800
  %v1809 = vcombine.high %v1807, %v1807
  %v1811 = vunpack.c.l.s4 1966171168
  %v1812 = vunpack.c.0.s8 %v1811
  %v1813 = vlaneseq
  %v1814 = vshrl.u32 %v1813, 7
  %v1815 = vsub.s32 %v1812, %v1814
  %v1816 = vrot.slane %v1800, %v1815
  %v1818 = vunpack.c.l.s4 1966171168
  %v1819 = vunpack.c.0.s8 %v1818
  %v1820 = vlaneseq
  %v1821 = vshrl.u32 %v1820, 7
  %v1822 = vsub.s32 %v1819, %v1821
  %v1823 = vrot.slane %v1807, %v1822
  %v1825 = vunpack.c.l.s4 1966171168
  %v1826 = vunpack.c.0.s8 %v1825
  %v1827 = vlaneseq
  %v1828 = vshrl.u32 %v1827, 7
  %v1829 = vsub.s32 %v1826, %v1828
  %v1830 = vrot.slane %v1808, %v1829
  %v1832 = vunpack.c.l.s4 1966171168
  %v1833 = vunpack.c.0.s8 %v1832
  %v1834 = vlaneseq
  %v1835 = vshrl.u32 %v1834, 7
  %v1836 = vsub.s32 %v1833, %v1835
  %v1837 = vrot.slane %v1809, %v1836
  %v1838 = vcombine.high %v1816, %v1816
  %v1839 = vcombine.high %v1823, %v1823
  %v1840 = vcombine.high %v1830, %v1830
  %v1841 = vcombine.high %v1837, %v1837
  %1850 = vst.msk [vmem:[%s5 + $0x5] sm:$0x1] %vm694, %v1816
  %1851 = vst.msk [vmem:[%s5 + $0xd] sm:$0x1] %vm694, %v1830
  %1852 = vst.msk [vmem:[%s5 + $0x15] sm:$0x1] %vm694, %v1838
  %1853 = vst.msk [vmem:[%s5 + $0x1d] sm:$0x1] %vm694, %v1840
  %1854 = vst.msk [vmem:[%s5 + $0x25] sm:$0x1] %vm694, %v1823
  %1855 = vst.msk [vmem:[%s5 + $0x2d] sm:$0x1] %vm694, %v1837
  %1856 = vst.msk [vmem:[%s5 + $0x35] sm:$0x1] %vm694, %v1839
  %1857 = vst.msk [vmem:[%s5 + $0x3d] sm:$0x1] %vm694, %v1841
  %1858 = vmatprep.subr.mxu0 %v419
  %1859 = vmatpush1.msra.mxu0 %v418
  %1860 = vmatprep.subr.mxu0 %v422
  %1861 = vmatpush1.msra.mxu0 %v421
  %1862 = vmatprep.subr.mxu0 %v425
  %1863 = vmatpush1.msra.mxu0 %v424
  %1864 = vmatprep.subr.mxu0 %v428
  %1865 = vmatpush1.msra.mxu0 %v427
  %1866 = vmatprep.subr.mxu0 %v431
  %1867 = vmatpush1.msra.mxu0 %v430
  %1868 = vmatprep.subr.mxu0 %v434
  %1869 = vmatpush1.msra.mxu0 %v433
  %1870 = vmatprep.subr.mxu0 %v437
  %1871 = vmatpush1.msra.mxu0 %v436
  %1872 = vmatprep.subr.mxu0 %v440
  %1873 = vmatpush1.msra.mxu0 %v439
  %1874 = vmatprep.subr.mxu0 %v443
  %1875 = vmatpush1.msra.mxu0 %v442
  %1876 = vmatprep.subr.mxu0 %v446
  %1877 = vmatpush1.msra.mxu0 %v445
  %1878 = vmatprep.subr.mxu0 %v449
  %1879 = vmatpush1.msra.mxu0 %v448
  %1880 = vmatprep.subr.mxu0 %v452
  %1881 = vmatpush1.msra.mxu0 %v451
  %1882 = vmatprep.subr.mxu0 %v455
  %1883 = vmatpush1.msra.mxu0 %v454
  %1884 = vmatprep.subr.mxu0 %v458
  %1885 = vmatpush1.msra.mxu0 %v457
  %1886 = vmatprep.subr.mxu0 %v461
  %1887 = vmatpush1.msra.mxu0 %v460
  %1888 = vmatprep.subr.mxu0 %v464
  %1889 = vmatpush1.msra.mxu0 %v463
  %1890 = vmatprep.subr.mxu0 0.0
  %1891 = vmatpush1.msra.mxu0 0.0
  %1892 = vmatprep.subr.mxu0 0.0
  %1893 = vmatpush1.msra.mxu0 0.0
  %1894 = vmatprep.subr.mxu0 0.0
  %1895 = vmatpush1.msra.mxu0 0.0
  %1896 = vmatprep.subr.mxu0 0.0
  %1897 = vmatpush1.msra.mxu0 0.0
  %1898 = vmatprep.subr.mxu0 0.0
  %1899 = vmatpush1.msra.mxu0 0.0
  %1900 = vmatprep.subr.mxu0 0.0
  %1901 = vmatpush1.msra.mxu0 0.0
  %1902 = vmatprep.subr.mxu0 0.0
  %1903 = vmatpush1.msra.mxu0 0.0
  %1904 = vmatprep.subr.mxu0 0.0
  %1905 = vmatpush1.msra.mxu0 0.0
  %1906 = vmatprep.subr.mxu0 0.0
  %1907 = vmatpush1.msra.mxu0 0.0
  %1908 = vmatprep.subr.mxu0 0.0
  %1909 = vmatpush1.msra.mxu0 0.0
  %1910 = vmatprep.subr.mxu0 0.0
  %1911 = vmatpush1.msra.mxu0 0.0
  %1912 = vmatprep.subr.mxu0 0.0
  %1913 = vmatpush1.msra.mxu0 0.0
  %1914 = vmatprep.subr.mxu0 0.0
  %1915 = vmatpush1.msra.mxu0 0.0
  %1916 = vmatprep.subr.mxu0 0.0
  %1917 = vmatpush1.msra.mxu0 0.0
  %1918 = vmatprep.subr.mxu0 0.0
  %1919 = vmatpush1.msra.mxu0 0.0
  %1920 = vmatprep.subr.mxu0 0.0
  %1921 = vmatpush1.msra.mxu0 0.0
  %1922 = vmatprep.mubr.f32.mxu0 0.0
  %1923 = vmatmul.mubr.f32.gmra.mrb[0].mxu0 %v1791
  %v1924 = vpop.f32.mrb[0].mxu0
  %v1925 = vadd.f32 0.0, %v1924
  %v1926 = vpop.f32.mrb[0].mxu0
  %v1927 = vadd.f32 0.0, %v1926
  %1928 = vdwg.mxu0
  %s1929 = scalar_lea.vmem [#allocation3], 144
  %v1930 = vld [vmem:[%s1929] sm:$0xff]
  %v1931 = vld [vmem:[%s1929 + $0x8] sm:$0xff]
  %v1932 = vld [vmem:[%s1929 + $0x10] sm:$0xff]
  %v1933 = vadd.f32 %v1930, %v1925
  %v1934 = vxor.u32 %v1933, 2147483648
  %v1935 = vmul.f32 %v1934, 1.442695
  %v1936 = vpow.pop %v1935
  %v1937 = vadd.f32 %v1936, 1.0
  %v1938 = vrcp.pop %v1937
  %v1939 = vmul.f32 1.0, %v1938
  %v1940 = vadd.f32 %v1931, %v1927
  %v1941 = vxor.u32 %v1940, 2147483648
  %v1942 = vmul.f32 %v1941, 1.442695
  %v1943 = vpow.pop %v1942
  %v1944 = vadd.f32 %v1943, 1.0
  %v1945 = vrcp.pop %v1944
  %v1946 = vmul.f32 1.0, %v1945
  %1947 = vmatprep.subr.mxu0 0.0
  %1948 = vmatpush1.msra.mxu0 %v420
  %1949 = vmatprep.subr.mxu0 0.0
  %1950 = vmatpush1.msra.mxu0 %v423
  %1951 = vmatprep.subr.mxu0 0.0
  %1952 = vmatpush1.msra.mxu0 %v426
  %1953 = vmatprep.subr.mxu0 0.0
  %1954 = vmatpush1.msra.mxu0 %v429
  %1955 = vmatprep.subr.mxu0 0.0
  %1956 = vmatpush1.msra.mxu0 %v432
  %1957 = vmatprep.subr.mxu0 0.0
  %1958 = vmatpush1.msra.mxu0 %v435
  %1959 = vmatprep.subr.mxu0 0.0
  %1960 = vmatpush1.msra.mxu0 %v438
  %1961 = vmatprep.subr.mxu0 0.0
  %1962 = vmatpush1.msra.mxu0 %v441
  %1963 = vmatprep.subr.mxu0 0.0
  %1964 = vmatpush1.msra.mxu0 %v444
  %1965 = vmatprep.subr.mxu0 0.0
  %1966 = vmatpush1.msra.mxu0 %v447
  %1967 = vmatprep.subr.mxu0 0.0
  %1968 = vmatpush1.msra.mxu0 %v450
  %1969 = vmatprep.subr.mxu0 0.0
  %1970 = vmatpush1.msra.mxu0 %v453
  %1971 = vmatprep.subr.mxu0 0.0
  %1972 = vmatpush1.msra.mxu0 %v456
  %1973 = vmatprep.subr.mxu0 0.0
  %1974 = vmatpush1.msra.mxu0 %v459
  %1975 = vmatprep.subr.mxu0 0.0
  %1976 = vmatpush1.msra.mxu0 %v462
  %1977 = vmatprep.subr.mxu0 0.0
  %1978 = vmatpush1.msra.mxu0 %v465
  %1979 = vmatprep.subr.mxu0 0.0
  %1980 = vmatpush1.msra.mxu0 0.0
  %1981 = vmatprep.subr.mxu0 0.0
  %1982 = vmatpush1.msra.mxu0 0.0
  %1983 = vmatprep.subr.mxu0 0.0
  %1984 = vmatpush1.msra.mxu0 0.0
  %1985 = vmatprep.subr.mxu0 0.0
  %1986 = vmatpush1.msra.mxu0 0.0
  %1987 = vmatprep.subr.mxu0 0.0
  %1988 = vmatpush1.msra.mxu0 0.0
  %1989 = vmatprep.subr.mxu0 0.0
  %1990 = vmatpush1.msra.mxu0 0.0
  %1991 = vmatprep.subr.mxu0 0.0
  %1992 = vmatpush1.msra.mxu0 0.0
  %1993 = vmatprep.subr.mxu0 0.0
  %1994 = vmatpush1.msra.mxu0 0.0
  %1995 = vmatprep.subr.mxu0 0.0
  %1996 = vmatpush1.msra.mxu0 0.0
  %1997 = vmatprep.subr.mxu0 0.0
  %1998 = vmatpush1.msra.mxu0 0.0
  %1999 = vmatprep.subr.mxu0 0.0
  %2000 = vmatpush1.msra.mxu0 0.0
  %2001 = vmatprep.subr.mxu0 0.0
  %2002 = vmatpush1.msra.mxu0 0.0
  %2003 = vmatprep.subr.mxu0 0.0
  %2004 = vmatpush1.msra.mxu0 0.0
  %2005 = vmatprep.subr.mxu0 0.0
  %2006 = vmatpush1.msra.mxu0 0.0
  %2007 = vmatprep.subr.mxu0 0.0
  %2008 = vmatpush1.msra.mxu0 0.0
  %2009 = vmatprep.subr.mxu0 0.0
  %2010 = vmatpush1.msra.mxu0 0.0
  %2011 = vmatprep.mubr.f32.mxu0 0.0
  %2012 = vmatmul.mubr.f32.gmra.mrb[0].mxu0 %v1791
  %v2013 = vpop.f32.mrb[0].mxu0
  %v2014 = vadd.f32 %v470, %v2013
  %v2015 = vpop.f32.mrb[0].mxu0
  %2016 = vdwg.mxu0
  %v2017 = vmul.f32 %v1939, %v2014
  %v2018 = vadd.f32 %v1932, %v2017
  %v2019 = vtanh.pop %v2018
  %v2020 = vsub.f32 %v1791, %v2019
  %v2021 = vmul.f32 %v1946, %v2020
  %v2022 = vadd.f32 %v2019, %v2021
  %v2024 = vcombine.high %v2022, %v2022
  %v2026 = vunpack.c.l.s4 1966171168
  %v2027 = vunpack.c.0.s8 %v2026
  %v2028 = vlaneseq
  %v2029 = vshrl.u32 %v2028, 7
  %v2030 = vsub.s32 %v2027, %v2029
  %v2031 = vrot.slane %v2022, %v2030
  %v2033 = vunpack.c.l.s4 1966171168
  %v2034 = vunpack.c.0.s8 %v2033
  %v2035 = vlaneseq
  %v2036 = vshrl.u32 %v2035, 7
  %v2037 = vsub.s32 %v2034, %v2036
  %v2038 = vrot.slane %v2024, %v2037
  %v2039 = vcombine.high %v2031, %v2031
  %v2040 = vcombine.high %v2038, %v2038
  %v2042 = vunpack.c.l.s4 1966171168
  %v2043 = vunpack.c.0.s8 %v2042
  %v2044 = vlaneseq
  %v2045 = vshrl.u32 %v2044, 7
  %v2046 = vsub.s32 %v2043, %v2045
  %v2047 = vrot.slane %v2031, %v2046
  %v2049 = vunpack.c.l.s4 1966171168
  %v2050 = vunpack.c.0.s8 %v2049
  %v2051 = vlaneseq
  %v2052 = vshrl.u32 %v2051, 7
  %v2053 = vsub.s32 %v2050, %v2052
  %v2054 = vrot.slane %v2038, %v2053
  %v2056 = vunpack.c.l.s4 1966171168
  %v2057 = vunpack.c.0.s8 %v2056
  %v2058 = vlaneseq
  %v2059 = vshrl.u32 %v2058, 7
  %v2060 = vsub.s32 %v2057, %v2059
  %v2061 = vrot.slane %v2039, %v2060
  %v2063 = vunpack.c.l.s4 1966171168
  %v2064 = vunpack.c.0.s8 %v2063
  %v2065 = vlaneseq
  %v2066 = vshrl.u32 %v2065, 7
  %v2067 = vsub.s32 %v2064, %v2066
  %v2068 = vrot.slane %v2040, %v2067
  %v2069 = vcombine.high %v2047, %v2047
  %v2070 = vcombine.high %v2054, %v2054
  %v2071 = vcombine.high %v2061, %v2061
  %v2072 = vcombine.high %v2068, %v2068
  %2081 = vst.msk [vmem:[%s5 + $0x6] sm:$0x1] %vm694, %v2047
  %2082 = vst.msk [vmem:[%s5 + $0xe] sm:$0x1] %vm694, %v2061
  %2083 = vst.msk [vmem:[%s5 + $0x16] sm:$0x1] %vm694, %v2069
  %2084 = vst.msk [vmem:[%s5 + $0x1e] sm:$0x1] %vm694, %v2071
  %2085 = vst.msk [vmem:[%s5 + $0x26] sm:$0x1] %vm694, %v2054
  %2086 = vst.msk [vmem:[%s5 + $0x2e] sm:$0x1] %vm694, %v2068
  %2087 = vst.msk [vmem:[%s5 + $0x36] sm:$0x1] %vm694, %v2070
  %2088 = vst.msk [vmem:[%s5 + $0x3e] sm:$0x1] %vm694, %v2072
  %2089 = vmatprep.subr.mxu0 %v419
  %2090 = vmatpush1.msra.mxu0 %v418
  %2091 = vmatprep.subr.mxu0 %v422
  %2092 = vmatpush1.msra.mxu0 %v421
  %2093 = vmatprep.subr.mxu0 %v425
  %2094 = vmatpush1.msra.mxu0 %v424
  %2095 = vmatprep.subr.mxu0 %v428
  %2096 = vmatpush1.msra.mxu0 %v427
  %2097 = vmatprep.subr.mxu0 %v431
  %2098 = vmatpush1.msra.mxu0 %v430
  %2099 = vmatprep.subr.mxu0 %v434
  %2100 = vmatpush1.msra.mxu0 %v433
  %2101 = vmatprep.subr.mxu0 %v437
  %2102 = vmatpush1.msra.mxu0 %v436
  %2103 = vmatprep.subr.mxu0 %v440
  %2104 = vmatpush1.msra.mxu0 %v439
  %2105 = vmatprep.subr.mxu0 %v443
  %2106 = vmatpush1.msra.mxu0 %v442
  %2107 = vmatprep.subr.mxu0 %v446
  %2108 = vmatpush1.msra.mxu0 %v445
  %2109 = vmatprep.subr.mxu0 %v449
  %2110 = vmatpush1.msra.mxu0 %v448
  %2111 = vmatprep.subr.mxu0 %v452
  %2112 = vmatpush1.msra.mxu0 %v451
  %2113 = vmatprep.subr.mxu0 %v455
  %2114 = vmatpush1.msra.mxu0 %v454
  %2115 = vmatprep.subr.mxu0 %v458
  %2116 = vmatpush1.msra.mxu0 %v457
  %2117 = vmatprep.subr.mxu0 %v461
  %2118 = vmatpush1.msra.mxu0 %v460
  %2119 = vmatprep.subr.mxu0 %v464
  %2120 = vmatpush1.msra.mxu0 %v463
  %2121 = vmatprep.subr.mxu0 0.0
  %2122 = vmatpush1.msra.mxu0 0.0
  %2123 = vmatprep.subr.mxu0 0.0
  %2124 = vmatpush1.msra.mxu0 0.0
  %2125 = vmatprep.subr.mxu0 0.0
  %2126 = vmatpush1.msra.mxu0 0.0
  %2127 = vmatprep.subr.mxu0 0.0
  %2128 = vmatpush1.msra.mxu0 0.0
  %2129 = vmatprep.subr.mxu0 0.0
  %2130 = vmatpush1.msra.mxu0 0.0
  %2131 = vmatprep.subr.mxu0 0.0
  %2132 = vmatpush1.msra.mxu0 0.0
  %2133 = vmatprep.subr.mxu0 0.0
  %2134 = vmatpush1.msra.mxu0 0.0
  %2135 = vmatprep.subr.mxu0 0.0
  %2136 = vmatpush1.msra.mxu0 0.0
  %2137 = vmatprep.subr.mxu0 0.0
  %2138 = vmatpush1.msra.mxu0 0.0
  %2139 = vmatprep.subr.mxu0 0.0
  %2140 = vmatpush1.msra.mxu0 0.0
  %2141 = vmatprep.subr.mxu0 0.0
  %2142 = vmatpush1.msra.mxu0 0.0
  %2143 = vmatprep.subr.mxu0 0.0
  %2144 = vmatpush1.msra.mxu0 0.0
  %2145 = vmatprep.subr.mxu0 0.0
  %2146 = vmatpush1.msra.mxu0 0.0
  %2147 = vmatprep.subr.mxu0 0.0
  %2148 = vmatpush1.msra.mxu0 0.0
  %2149 = vmatprep.subr.mxu0 0.0
  %2150 = vmatpush1.msra.mxu0 0.0
  %2151 = vmatprep.subr.mxu0 0.0
  %2152 = vmatpush1.msra.mxu0 0.0
  %2153 = vmatprep.mubr.f32.mxu0 0.0
  %2154 = vmatmul.mubr.f32.gmra.mrb[0].mxu0 %v2022
  %v2155 = vpop.f32.mrb[0].mxu0
  %v2156 = vadd.f32 0.0, %v2155
  %v2157 = vpop.f32.mrb[0].mxu0
  %v2158 = vadd.f32 0.0, %v2157
  %2159 = vdwg.mxu0
  %s2160 = scalar_lea.vmem [#allocation3], 168
  %v2161 = vld [vmem:[%s2160] sm:$0xff]
  %v2162 = vld [vmem:[%s2160 + $0x8] sm:$0xff]
  %v2163 = vld [vmem:[%s2160 + $0x10] sm:$0xff]
  %v2164 = vadd.f32 %v2161, %v2156
  %v2165 = vxor.u32 %v2164, 2147483648
  %v2166 = vmul.f32 %v2165, 1.442695
  %v2167 = vpow.pop %v2166
  %v2168 = vadd.f32 %v2167, 1.0
  %v2169 = vrcp.pop %v2168
  %v2170 = vmul.f32 1.0, %v2169
  %v2171 = vadd.f32 %v2162, %v2158
  %v2172 = vxor.u32 %v2171, 2147483648
  %v2173 = vmul.f32 %v2172, 1.442695
  %v2174 = vpow.pop %v2173
  %v2175 = vadd.f32 %v2174, 1.0
  %v2176 = vrcp.pop %v2175
  %v2177 = vmul.f32 1.0, %v2176
  %2178 = vmatprep.subr.mxu0 0.0
  %2179 = vmatpush1.msra.mxu0 %v420
  %2180 = vmatprep.subr.mxu0 0.0
  %2181 = vmatpush1.msra.mxu0 %v423
  %2182 = vmatprep.subr.mxu0 0.0
  %2183 = vmatpush1.msra.mxu0 %v426
  %2184 = vmatprep.subr.mxu0 0.0
  %2185 = vmatpush1.msra.mxu0 %v429
  %2186 = vmatprep.subr.mxu0 0.0
  %2187 = vmatpush1.msra.mxu0 %v432
  %2188 = vmatprep.subr.mxu0 0.0
  %2189 = vmatpush1.msra.mxu0 %v435
  %2190 = vmatprep.subr.mxu0 0.0
  %2191 = vmatpush1.msra.mxu0 %v438
  %2192 = vmatprep.subr.mxu0 0.0
  %2193 = vmatpush1.msra.mxu0 %v441
  %2194 = vmatprep.subr.mxu0 0.0
  %2195 = vmatpush1.msra.mxu0 %v444
  %2196 = vmatprep.subr.mxu0 0.0
  %2197 = vmatpush1.msra.mxu0 %v447
  %2198 = vmatprep.subr.mxu0 0.0
  %2199 = vmatpush1.msra.mxu0 %v450
  %2200 = vmatprep.subr.mxu0 0.0
  %2201 = vmatpush1.msra.mxu0 %v453
  %2202 = vmatprep.subr.mxu0 0.0
  %2203 = vmatpush1.msra.mxu0 %v456
  %2204 = vmatprep.subr.mxu0 0.0
  %2205 = vmatpush1.msra.mxu0 %v459
  %2206 = vmatprep.subr.mxu0 0.0
  %2207 = vmatpush1.msra.mxu0 %v462
  %2208 = vmatprep.subr.mxu0 0.0
  %2209 = vmatpush1.msra.mxu0 %v465
  %2210 = vmatprep.subr.mxu0 0.0
  %2211 = vmatpush1.msra.mxu0 0.0
  %2212 = vmatprep.subr.mxu0 0.0
  %2213 = vmatpush1.msra.mxu0 0.0
  %2214 = vmatprep.subr.mxu0 0.0
  %2215 = vmatpush1.msra.mxu0 0.0
  %2216 = vmatprep.subr.mxu0 0.0
  %2217 = vmatpush1.msra.mxu0 0.0
  %2218 = vmatprep.subr.mxu0 0.0
  %2219 = vmatpush1.msra.mxu0 0.0
  %2220 = vmatprep.subr.mxu0 0.0
  %2221 = vmatpush1.msra.mxu0 0.0
  %2222 = vmatprep.subr.mxu0 0.0
  %2223 = vmatpush1.msra.mxu0 0.0
  %2224 = vmatprep.subr.mxu0 0.0
  %2225 = vmatpush1.msra.mxu0 0.0
  %2226 = vmatprep.subr.mxu0 0.0
  %2227 = vmatpush1.msra.mxu0 0.0
  %2228 = vmatprep.subr.mxu0 0.0
  %2229 = vmatpush1.msra.mxu0 0.0
  %2230 = vmatprep.subr.mxu0 0.0
  %2231 = vmatpush1.msra.mxu0 0.0
  %2232 = vmatprep.subr.mxu0 0.0
  %2233 = vmatpush1.msra.mxu0 0.0
  %2234 = vmatprep.subr.mxu0 0.0
  %2235 = vmatpush1.msra.mxu0 0.0
  %2236 = vmatprep.subr.mxu0 0.0
  %2237 = vmatpush1.msra.mxu0 0.0
  %2238 = vmatprep.subr.mxu0 0.0
  %2239 = vmatpush1.msra.mxu0 0.0
  %2240 = vmatprep.subr.mxu0 0.0
  %2241 = vmatpush1.msra.mxu0 0.0
  %2242 = vmatprep.mubr.f32.mxu0 0.0
  %2243 = vmatmul.mubr.f32.gmra.mrb[0].mxu0 %v2022
  %v2244 = vpop.f32.mrb[0].mxu0
  %v2245 = vadd.f32 %v470, %v2244
  %v2246 = vpop.f32.mrb[0].mxu0
  %2247 = vdwg.mxu0
  %v2248 = vmul.f32 %v2170, %v2245
  %v2249 = vadd.f32 %v2163, %v2248
  %v2250 = vtanh.pop %v2249
  %v2251 = vsub.f32 %v2022, %v2250
  %v2252 = vmul.f32 %v2177, %v2251
  %v2253 = vadd.f32 %v2250, %v2252
  %v2255 = vcombine.high %v2253, %v2253
  %v2257 = vunpack.c.l.s4 1966171168
  %v2258 = vunpack.c.0.s8 %v2257
  %v2259 = vlaneseq
  %v2260 = vshrl.u32 %v2259, 7
  %v2261 = vsub.s32 %v2258, %v2260
  %v2262 = vrot.slane %v2253, %v2261
  %v2264 = vunpack.c.l.s4 1966171168
  %v2265 = vunpack.c.0.s8 %v2264
  %v2266 = vlaneseq
  %v2267 = vshrl.u32 %v2266, 7
  %v2268 = vsub.s32 %v2265, %v2267
  %v2269 = vrot.slane %v2255, %v2268
  %v2270 = vcombine.high %v2262, %v2262
  %v2271 = vcombine.high %v2269, %v2269
  %v2273 = vunpack.c.l.s4 1966171168
  %v2274 = vunpack.c.0.s8 %v2273
  %v2275 = vlaneseq
  %v2276 = vshrl.u32 %v2275, 7
  %v2277 = vsub.s32 %v2274, %v2276
  %v2278 = vrot.slane %v2262, %v2277
  %v2280 = vunpack.c.l.s4 1966171168
  %v2281 = vunpack.c.0.s8 %v2280
  %v2282 = vlaneseq
  %v2283 = vshrl.u32 %v2282, 7
  %v2284 = vsub.s32 %v2281, %v2283
  %v2285 = vrot.slane %v2269, %v2284
  %v2287 = vunpack.c.l.s4 1966171168
  %v2288 = vunpack.c.0.s8 %v2287
  %v2289 = vlaneseq
  %v2290 = vshrl.u32 %v2289, 7
  %v2291 = vsub.s32 %v2288, %v2290
  %v2292 = vrot.slane %v2270, %v2291
  %v2294 = vunpack.c.l.s4 1966171168
  %v2295 = vunpack.c.0.s8 %v2294
  %v2296 = vlaneseq
  %v2297 = vshrl.u32 %v2296, 7
  %v2298 = vsub.s32 %v2295, %v2297
  %v2299 = vrot.slane %v2271, %v2298
  %v2300 = vcombine.high %v2278, %v2278
  %v2301 = vcombine.high %v2285, %v2285
  %v2302 = vcombine.high %v2292, %v2292
  %v2303 = vcombine.high %v2299, %v2299
  %2312 = vst.msk [vmem:[%s5 + $0x7] sm:$0x1] %vm694, %v2278
  %2313 = vst.msk [vmem:[%s5 + $0xf] sm:$0x1] %vm694, %v2292
  %2314 = vst.msk [vmem:[%s5 + $0x17] sm:$0x1] %vm694, %v2300
  %2315 = vst.msk [vmem:[%s5 + $0x1f] sm:$0x1] %vm694, %v2302
  %2316 = vst.msk [vmem:[%s5 + $0x27] sm:$0x1] %vm694, %v2285
  %2317 = vst.msk [vmem:[%s5 + $0x2f] sm:$0x1] %vm694, %v2299
  %2318 = vst.msk [vmem:[%s5 + $0x37] sm:$0x1] %vm694, %v2301
  %2319 = vst.msk [vmem:[%s5 + $0x3f] sm:$0x1] %vm694, %v2303
  %2320 = vst [vmem:[#allocation2] sm:$0xff] %v2253
  %vm2321 = vcmask 261120
  %2322 = vst.msk [vmem:[%s6] sm:$0xff] %vm2321, %v2253
  // Predicated region
  $region26: #{encoder_rnn_forward.1} parent=0 // pred_check
    _
  $region27: #{encoder_rnn_forward.1} parent=0 // pred_check_branch
    %2324 = sbr.rel (0) target = $region29
  $region28: #{encoder_rnn_forward.1} parent=0 // pred_region
    _
  $region29: #{encoder_rnn_forward.1} parent=0 // pred_fallthru
    _
  // Predicated region
  $region30: #{encoder_rnn_forward.1} parent=0 // pred_check
    _
  $region31: #{encoder_rnn_forward.1} parent=0 // pred_check_branch
    %2326 = sbr.rel (0) target = $region33
  $region32: #{encoder_rnn_forward.1} parent=0 // pred_region
    _
  $region33: #{encoder_rnn_forward.1} parent=0 // pred_fallthru
    _
  // Predicated region
  $region34: #{encoder_rnn_forward.1} parent=0 // pred_check
    _
  $region35: #{encoder_rnn_forward.1} parent=0 // pred_check_branch
    %2328 = sbr.rel (0) target = $region37
  $region36: #{encoder_rnn_forward.1} parent=0 // pred_region
    _
  $region37: #{encoder_rnn_forward.1} parent=0 // pred_fallthru
    _
  // Predicated region
  $region38: #{encoder_rnn_forward.1} parent=0 // pred_check
    _
  $region39: #{encoder_rnn_forward.1} parent=0 // pred_check_branch
    %2330 = sbr.rel (0) target = $region41
  $region40: #{encoder_rnn_forward.1} parent=0 // pred_region
    _
  $region41: #{encoder_rnn_forward.1} parent=0 // pred_fallthru
    _

</llo_original>
